<compile_context>
chip_gen: v7x
topology: tpu7x:2x2x1
jax: 0.10.0
libtpu: 0.0.40
codegen_flags: <defaults>
</compile_context>

<pallas_src>
import functools

import jax
import jax.numpy as jnp
from jax import lax
from jax.experimental import pallas as pl
from jax.experimental.pallas import tpu as pltpu


# --------------------- Pass 1: global min / max of the raw volume ---------------------

def _minmax_kernel(x_ref, min_ref, max_ref, *, rows_total, rows_per_block, needs_mask):
    t = x_ref[...]                                        # (bx, Y, Z) f32
    if needs_mask:                                        # static trace-time branch
        i = pl.program_id(0)
        limit = rows_total - i * rows_per_block           # valid leading rows in this block
        ridx = lax.broadcasted_iota(jnp.int32, t.shape, 0)
        valid = ridx < limit
        t_min = jnp.where(valid, t, jnp.float32(jnp.inf))
        t_max = jnp.where(valid, t, jnp.float32(-jnp.inf))
    else:
        t_min = t_max = t
    # reduce the leading (page) axis first, then the 2-D full reduction
    min_ref[...] = jnp.full((8, 128), jnp.min(jnp.min(t_min, axis=0)), jnp.float32)
    max_ref[...] = jnp.full((8, 128), jnp.max(jnp.max(t_max, axis=0)), jnp.float32)


def global_min_max(x, *, target_block_bytes=2 << 20):
    """Global min & max of a 3-D volume.  No flatten / pad / slice copies in HBM."""
    assert x.ndim == 3
    X, Y, Z = x.shape
    x = x.astype(jnp.float32)
    yz_bytes = Y * Z * 4
    bx = max(1, min(X, target_block_bytes // max(1, yz_bytes)))
    if bx >= X and X > 1:          # >= 2 grid steps so megacore (v7x) can shard pass 1
        bx = -(-X // 2)
    nsteps = -(-X // bx)
    needs_mask = (X % bx) != 0

    kernel = functools.partial(_minmax_kernel, rows_total=X,
                               rows_per_block=bx, needs_mask=needs_mask)
    vmem_limit = int(min(48 << 20, max(32 << 20, 3 * bx * yz_bytes)))

    mins, maxs = pl.pallas_call(
        kernel,
        out_shape=(jax.ShapeDtypeStruct((nsteps * 8, 128), jnp.float32),
                   jax.ShapeDtypeStruct((nsteps * 8, 128), jnp.float32)),
        grid=(nsteps,),
        in_specs=[pl.BlockSpec((bx, Y, Z), lambda i: (i, 0, 0))],
        out_specs=(pl.BlockSpec((8, 128), lambda i: (i, 0)),
                   pl.BlockSpec((8, 128), lambda i: (i, 0))),
        compiler_params=pltpu.CompilerParams(
            dimension_semantics=("parallel",),
            vmem_limit_bytes=vmem_limit),
    )(x)
    return jnp.min(mins), jnp.max(maxs)


# ---------- Pass 2: fused patch gather + global normalize + per-patch renorm + y binarize ----------

def _fused_patch_kernel(g_ref, x_ref, y_ref, xo_ref, yo_ref, *, patch_sz, y_offs, z_offs):
    P = patch_sz
    gmin = g_ref[0]
    grng = g_ref[1] - g_ref[0]
    # Guard: the reference module divides by 0 (NaN/Inf) for a constant volume;
    # we keep the output finite (0) in that degenerate case.
    grng = jnp.where(grng == 0.0, jnp.float32(1.0), grng)
    j = 0
    for cy in y_offs:                                     # static trace-time loops
        for cz in z_offs:
            xp = x_ref[:, cy:cy + P, cz:cz + P]           # (P, P, P) f32, static slice
            rawmax = jnp.max(jnp.max(xp, axis=0))         # patch max of the raw data
            # if patch.max()==0 after global norm (rawmax==gmin): skip the renorm divide
            denom = jnp.where(rawmax == gmin, grng, rawmax - gmin)
            scale = jnp.float32(1.0) / denom              # exact scalar reciprocal
            xo_ref[j, :, :, :] = (xp - gmin) * scale      # single subtract + scale / elem
            yo_ref[j, :, :, :] = (y_ref[:, cy:cy + P, cz:cz + P] != 0).astype(jnp.uint8)
            j += 1


def fused_patch_pipeline(x_in, y_in, gmin, gmax, patch_sz):
    X, Y, Z = x_in.shape
    P = patch_sz
    xs = list(range(P, X - P, P))
    ys = list(range(P, Y - P, P))
    zs = list(range(P, Z - P, P))
    nx, ny, nz = len(xs), len(ys), len(zs)
    n = nx * ny * nz
    if n == 0:
        return (jnp.zeros((0, P, P, P), jnp.float32),
                jnp.zeros((0, P, P, P), jnp.uint8))

    g = jnp.stack([gmin, gmax]).astype(jnp.float32)       # (2,) -> SMEM scalars
    kernel = functools.partial(_fused_patch_kernel, patch_sz=P, y_offs=ys, z_offs=zs)

    # per-step traffic: one (P, Y, Z) x+y slab in, ny*nz patches out (f32 + u8)
    per_step = P * Y * Z * 5 + ny * nz * (P ** 3) * 5
    vmem_limit = int(min(48 << 20, max(32 << 20, 3 * per_step)))

    xo, yo = pl.pallas_call(
        kernel,
        out_shape=(jax.ShapeDtypeStruct((n, P, P, P), jnp.float32),
                   jax.ShapeDtypeStruct((n, P, P, P), jnp.uint8)),
        grid=(nx,),
        in_specs=[pl.BlockSpec(memory_space=pltpu.MemorySpace.SMEM),
                  # patch coords are (i+1)*P, i.e. block index i+1 -> gather folded
                  # into the index_map; full Y/Z dims so any dtype/patch size is legal.
                  pl.BlockSpec((P, Y, Z), lambda i: (i + 1, 0, 0)),
                  pl.BlockSpec((P, Y, Z), lambda i: (i + 1, 0, 0))],
        out_specs=(pl.BlockSpec((ny * nz, P, P, P), lambda i: (i, 0, 0, 0)),
                   pl.BlockSpec((ny * nz, P, P, P), lambda i: (i, 0, 0, 0))),
        compiler_params=pltpu.CompilerParams(
            dimension_semantics=("parallel",),
            vmem_limit_bytes=vmem_limit),
    )(g, x_in.astype(jnp.float32), y_in.astype(jnp.uint8))
    return xo, yo


# --------------------------------- module forward ---------------------------------

def _patch_coords(shape, patch_sz):
    xs = range(patch_sz, shape[0] - patch_sz, patch_sz)
    ys = range(patch_sz, shape[1] - patch_sz, patch_sz)
    zs = range(patch_sz, shape[2] - patch_sz, patch_sz)
    return [(a, b, c) for a in xs for b in ys for c in zs]


def data_preprocessing_forward(x_in, y_in, patch_sz):
    """Replicates DataPreprocessingModule's normalization + forward patch generation.
    Returns (N, 1, P, P, P) float32 x-patches and (N, 1, P, P, P) uint8 y-patches."""
    # TODO(synk): clear_directory_files / torch.save / affine bookkeeping are host I/O.
    gmin, gmax = global_min_max(x_in)                       # pass 1: one HBM read of x
    xo, yo = fused_patch_pipeline(x_in, y_in, gmin, gmax, patch_sz)   # pass 2: fused
    return xo[:, None], yo[:, None]                         # free reshape: add channel dim


# ------------------------------------- demo -------------------------------------

if __name__ == "__main__":
    key = jax.random.PRNGKey(0)
    kx, ky = jax.random.split(key)

    PATCH = 8
    VOL = (32, 32, 32)   # patch coords [8, 16] per axis -> 8 patches

    # synthetic "NIfTI" volumes
    x_in = jax.random.normal(kx, VOL, dtype=jnp.float32) * 100.0 + 7.0
    y_in = jax.random.randint(ky, VOL, 0, 5).astype(jnp.uint8)   # multi-label mask

    fwd = jax.jit(data_preprocessing_forward, static_argnums=(2,))
    x_patches, y_patches = fwd(x_in, y_in, PATCH)
    jax.block_until_ready((x_patches, y_patches))

    assert x_patches.shape == (8, 1, PATCH, PATCH, PATCH)
    assert x_patches.dtype == jnp.float32
    assert y_patches.shape == (8, 1, PATCH, PATCH, PATCH)
    assert y_patches.dtype == jnp.uint8

    # pure-JAX reference check (mirrors the PyTorch module's math)
    xg = x_in - jnp.min(x_in)
    xg = xg / jnp.max(xg)
    yb = (y_in != 0).astype(jnp.uint8)
    coords = _patch_coords(VOL, PATCH)
    for idx, (a, b, c) in enumerate(coords):
        xr = xg[a:a + PATCH, b:b + PATCH, c:c + PATCH]
        m = jnp.max(xr)
        xr = jnp.where(m != 0, xr / jnp.where(m == 0, 1.0, m), xr)
        assert jnp.allclose(x_patches[idx, 0], xr, rtol=1e-5, atol=1e-6)
        assert jnp.array_equal(y_patches[idx, 0],
                               yb[a:a + PATCH, b:b + PATCH, c:c + PATCH])

    print("KERNEL_OK")
</pallas_src>

<mosaic_0001>
module attributes {stable_mosaic.version = 11 : i64} {
  func.func @_minmax_kernel(%arg0: i32, %arg1: memref<16x32x32xf32, #tpu.memory_space<vmem>>, %arg2: memref<8x128xf32, #tpu.memory_space<vmem>>, %arg3: memref<8x128xf32, #tpu.memory_space<vmem>>) attributes {dimension_semantics = [#tpu.dimension_semantics<parallel>], iteration_bounds = array<i64: 2>, scalar_prefetch = 0 : i64, scratch_operands = 0 : i64, tpu.core_type = #tpu.core_type<tc>, window_params = [{transform_indices = @transform_0, window_bounds = array<i64: 16, 32, 32>}, {transform_indices = @transform_1, window_bounds = array<i64: 8, 128>}, {transform_indices = @transform_2, window_bounds = array<i64: 8, 128>}]} {
    %c0 = arith.constant 0 : index
    %c0_0 = arith.constant 0 : index
    %c0_1 = arith.constant 0 : index
    %0 = vector.load %arg1[%c0, %c0_0, %c0_1] : memref<16x32x32xf32, #tpu.memory_space<vmem>>, vector<16x32x32xf32>
    %cst = arith.constant dense<0x7F800000> : vector<32x32xf32>
    %1 = vector.multi_reduction <minimumf>, %0, %cst [0] : vector<16x32x32xf32> to vector<32x32xf32>
    %2 = vector.shape_cast %1 : vector<32x32xf32> to vector<1x32x32xf32>
    %cst_2 = arith.constant dense<0x7F800000> : vector<1xf32>
    %3 = vector.multi_reduction <minimumf>, %2, %cst_2 [1, 2] : vector<1x32x32xf32> to vector<1xf32>
    %4 = vector.shape_cast %3 : vector<1xf32> to vector<1x1x1xf32>
    %5 = vector.extract %4[0, 0, 0] : f32 from vector<1x1x1xf32>
    %6 = vector.broadcast %5 : f32 to vector<8x128xf32>
    %c0_3 = arith.constant 0 : index
    %c0_4 = arith.constant 0 : index
    %7 = vector.load %arg2[%c0_3, %c0_4] : memref<8x128xf32, #tpu.memory_space<vmem>>, vector<8x128xf32>
    tpu.vector_store %arg2[%c0_3, %c0_4], %6 {strides = array<i32>} : memref<8x128xf32, #tpu.memory_space<vmem>>, vector<8x128xf32>,
    %cst_5 = arith.constant dense<0xFF800000> : vector<32x32xf32>
    %8 = vector.multi_reduction <maximumf>, %0, %cst_5 [0] : vector<16x32x32xf32> to vector<32x32xf32>
    %9 = vector.shape_cast %8 : vector<32x32xf32> to vector<1x32x32xf32>
    %cst_6 = arith.constant dense<0xFF800000> : vector<1xf32>
    %10 = vector.multi_reduction <maximumf>, %9, %cst_6 [1, 2] : vector<1x32x32xf32> to vector<1xf32>
    %11 = vector.shape_cast %10 : vector<1xf32> to vector<1x1x1xf32>
    %12 = vector.extract %11[0, 0, 0] : f32 from vector<1x1x1xf32>
    %13 = vector.broadcast %12 : f32 to vector<8x128xf32>
    %c0_7 = arith.constant 0 : index
    %c0_8 = arith.constant 0 : index
    %14 = vector.load %arg3[%c0_7, %c0_8] : memref<8x128xf32, #tpu.memory_space<vmem>>, vector<8x128xf32>
    tpu.vector_store %arg3[%c0_7, %c0_8], %13 {strides = array<i32>} : memref<8x128xf32, #tpu.memory_space<vmem>>, vector<8x128xf32>,
    return
  }
  func.func @transform_0(%arg0: i32) -> (i32, i32, i32) {
    %c0_i32 = arith.constant 0 : i32
    %c0_i32_0 = arith.constant 0 : i32
    %c0_i32_1 = arith.constant 0 : i32
    return %arg0, %c0_i32, %c0_i32_0 : i32, i32, i32
  }
  func.func @transform_1(%arg0: i32) -> (i32, i32) {
    %c0_i32 = arith.constant 0 : i32
    %c0_i32_0 = arith.constant 0 : i32
    return %arg0, %c0_i32 : i32, i32
  }
  func.func @transform_2(%arg0: i32) -> (i32, i32) {
    %c0_i32 = arith.constant 0 : i32
    %c0_i32_0 = arith.constant 0 : i32
    return %arg0, %c0_i32 : i32, i32
  }
}

module attributes {stable_mosaic.version = 11 : i64} {
  func.func @_fused_patch_kernel(%arg0: i32, %arg1: memref<2xf32, #tpu.memory_space<smem>>, %arg2: memref<8x32x32xf32, #tpu.memory_space<vmem>>, %arg3: memref<8x32x32xi8, #tpu.memory_space<vmem>>, %arg4: memref<4x8x8x8xf32, #tpu.memory_space<vmem>>, %arg5: memref<4x8x8x8xi8, #tpu.memory_space<vmem>>) attributes {dimension_semantics = [#tpu.dimension_semantics<parallel>], iteration_bounds = array<i64: 2>, scalar_prefetch = 0 : i64, scratch_operands = 0 : i64, tpu.core_type = #tpu.core_type<tc>, window_params = [{transform_indices = @transform_0, window_bounds = array<i64: 2>}, {transform_indices = @transform_1, window_bounds = array<i64: 8, 32, 32>}, {transform_indices = @transform_2, window_bounds = array<i64: 8, 32, 32>}, {transform_indices = @transform_3, window_bounds = array<i64: 4, 8, 8, 8>}, {transform_indices = @transform_4, window_bounds = array<i64: 4, 8, 8, 8>}]} {
    %c0 = arith.constant 0 : index
    %0 = memref.load %arg1[%c0] : memref<2xf32, #tpu.memory_space<smem>>
    %c1 = arith.constant 1 : index
    %1 = memref.load %arg1[%c1] : memref<2xf32, #tpu.memory_space<smem>>
    %c0_0 = arith.constant 0 : index
    %2 = memref.load %arg1[%c0_0] : memref<2xf32, #tpu.memory_space<smem>>
    %3 = arith.subf %1, %2 : f32
    %cst = arith.constant 0.000000e+00 : f32
    %4 = arith.cmpf oeq, %3, %cst : f32
    %cst_1 = arith.constant 1.000000e+00 : f32
    %5 = arith.select %4, %cst_1, %3 : f32
    %c0_2 = arith.constant 0 : index
    %c8 = arith.constant 8 : index
    %c8_3 = arith.constant 8 : index
    %6 = vector.load %arg2[%c0_2, %c8, %c8_3] : memref<8x32x32xf32, #tpu.memory_space<vmem>>, vector<8x8x8xf32>
    %cst_4 = arith.constant dense<0xFF800000> : vector<8x8xf32>
    %7 = vector.multi_reduction <maximumf>, %6, %cst_4 [0] : vector<8x8x8xf32> to vector<8x8xf32>
    %8 = vector.shape_cast %7 : vector<8x8xf32> to vector<1x8x8xf32>
    %cst_5 = arith.constant dense<0xFF800000> : vector<1xf32>
    %9 = vector.multi_reduction <maximumf>, %8, %cst_5 [1, 2] : vector<1x8x8xf32> to vector<1xf32>
    %10 = vector.shape_cast %9 : vector<1xf32> to vector<1x1x1xf32>
    %11 = vector.extract %10[0, 0, 0] : f32 from vector<1x1x1xf32>
    %12 = arith.cmpf oeq, %11, %0 : f32
    %13 = arith.subf %11, %0 : f32
    %14 = arith.select %12, %5, %13 : f32
    %cst_6 = arith.constant 1.000000e+00 : f32
    %15 = arith.divf %cst_6, %14 : f32
    %16 = vector.broadcast %0 : f32 to vector<8x8x8xf32>
    %17 = arith.subf %6, %16 : vector<8x8x8xf32>
    %18 = vector.broadcast %15 : f32 to vector<8x8x8xf32>
    %19 = arith.mulf %17, %18 : vector<8x8x8xf32>
    %c0_7 = arith.constant 0 : index
    %c0_8 = arith.constant 0 : index
    %c0_9 = arith.constant 0 : index
    %c0_10 = arith.constant 0 : index
    %20 = vector.load %arg4[%c0_7, %c0_8, %c0_9, %c0_10] : memref<4x8x8x8xf32, #tpu.memory_space<vmem>>, vector<1x8x8x8xf32>
    %21 = vector.shape_cast %20 : vector<1x8x8x8xf32> to vector<8x8x8xf32>
    %22 = vector.shape_cast %19 : vector<8x8x8xf32> to vector<1x8x8x8xf32>
    tpu.vector_store %arg4[%c0_7, %c0_8, %c0_9, %c0_10], %22 {strides = array<i32>} : memref<4x8x8x8xf32, #tpu.memory_space<vmem>>, vector<1x8x8x8xf32>,
    %c0_11 = arith.constant 0 : index
    %c8_12 = arith.constant 8 : index
    %c8_13 = arith.constant 8 : index
    %23 = vector.load %arg3[%c0_11, %c8_12, %c8_13] : memref<8x32x32xi8, #tpu.memory_space<vmem>>, vector<8x8x8xi8>
    %c0_i8 = arith.constant 0 : i8
    %24 = vector.broadcast %c0_i8 : i8 to vector<8x8x8xi8>
    %25 = arith.cmpi ne, %23, %24 : vector<8x8x8xi8>
    %26 = arith.extui %25 : vector<8x8x8xi1> to vector<8x8x8xi8>
    %c0_14 = arith.constant 0 : index
    %c0_15 = arith.constant 0 : index
    %c0_16 = arith.constant 0 : index
    %c0_17 = arith.constant 0 : index
    %27 = vector.load %arg5[%c0_14, %c0_15, %c0_16, %c0_17] : memref<4x8x8x8xi8, #tpu.memory_space<vmem>>, vector<1x8x8x8xi8>
    %28 = vector.shape_cast %27 : vector<1x8x8x8xi8> to vector<8x8x8xi8>
    %29 = vector.shape_cast %26 : vector<8x8x8xi8> to vector<1x8x8x8xi8>
    tpu.vector_store %arg5[%c0_14, %c0_15, %c0_16, %c0_17], %29 {strides = array<i32>} : memref<4x8x8x8xi8, #tpu.memory_space<vmem>>, vector<1x8x8x8xi8>,
    %c0_18 = arith.constant 0 : index
    %c8_19 = arith.constant 8 : index
    %c16 = arith.constant 16 : index
    %30 = vector.load %arg2[%c0_18, %c8_19, %c16] : memref<8x32x32xf32, #tpu.memory_space<vmem>>, vector<8x8x8xf32>
    %cst_20 = arith.constant dense<0xFF800000> : vector<8x8xf32>
    %31 = vector.multi_reduction <maximumf>, %30, %cst_20 [0] : vector<8x8x8xf32> to vector<8x8xf32>
    %32 = vector.shape_cast %31 : vector<8x8xf32> to vector<1x8x8xf32>
    %cst_21 = arith.constant dense<0xFF800000> : vector<1xf32>
    %33 = vector.multi_reduction <maximumf>, %32, %cst_21 [1, 2] : vector<1x8x8xf32> to vector<1xf32>
    %34 = vector.shape_cast %33 : vector<1xf32> to vector<1x1x1xf32>
    %35 = vector.extract %34[0, 0, 0] : f32 from vector<1x1x1xf32>
    %36 = arith.cmpf oeq, %35, %0 : f32
    %37 = arith.subf %35, %0 : f32
    %38 = arith.select %36, %5, %37 : f32
    %cst_22 = arith.constant 1.000000e+00 : f32
    %39 = arith.divf %cst_22, %38 : f32
    %40 = vector.broadcast %0 : f32 to vector<8x8x8xf32>
    %41 = arith.subf %30, %40 : vector<8x8x8xf32>
    %42 = vector.broadcast %39 : f32 to vector<8x8x8xf32>
    %43 = arith.mulf %41, %42 : vector<8x8x8xf32>
    %c1_23 = arith.constant 1 : index
    %c0_24 = arith.constant 0 : index
    %c0_25 = arith.constant 0 : index
    %c0_26 = arith.constant 0 : index
    %44 = vector.load %arg4[%c1_23, %c0_24, %c0_25, %c0_26] : memref<4x8x8x8xf32, #tpu.memory_space<vmem>>, vector<1x8x8x8xf32>
    %45 = vector.shape_cast %44 : vector<1x8x8x8xf32> to vector<8x8x8xf32>
    %46 = vector.shape_cast %43 : vector<8x8x8xf32> to vector<1x8x8x8xf32>
    tpu.vector_store %arg4[%c1_23, %c0_24, %c0_25, %c0_26], %46 {strides = array<i32>} : memref<4x8x8x8xf32, #tpu.memory_space<vmem>>, vector<1x8x8x8xf32>,
    %c0_27 = arith.constant 0 : index
    %c8_28 = arith.constant 8 : index
    %c16_29 = arith.constant 16 : index
    %47 = vector.load %arg3[%c0_27, %c8_28, %c16_29] : memref<8x32x32xi8, #tpu.memory_space<vmem>>, vector<8x8x8xi8>
    %c0_i8_30 = arith.constant 0 : i8
    %48 = vector.broadcast %c0_i8_30 : i8 to vector<8x8x8xi8>
    %49 = arith.cmpi ne, %47, %48 : vector<8x8x8xi8>
    %50 = arith.extui %49 : vector<8x8x8xi1> to vector<8x8x8xi8>
    %c1_31 = arith.constant 1 : index
    %c0_32 = arith.constant 0 : index
    %c0_33 = arith.constant 0 : index
    %c0_34 = arith.constant 0 : index
    %51 = vector.load %arg5[%c1_31, %c0_32, %c0_33, %c0_34] : memref<4x8x8x8xi8, #tpu.memory_space<vmem>>, vector<1x8x8x8xi8>
    %52 = vector.shape_cast %51 : vector<1x8x8x8xi8> to vector<8x8x8xi8>
    %53 = vector.shape_cast %50 : vector<8x8x8xi8> to vector<1x8x8x8xi8>
    tpu.vector_store %arg5[%c1_31, %c0_32, %c0_33, %c0_34], %53 {strides = array<i32>} : memref<4x8x8x8xi8, #tpu.memory_space<vmem>>, vector<1x8x8x8xi8>,
    %c0_35 = arith.constant 0 : index
    %c16_36 = arith.constant 16 : index
    %c8_37 = arith.constant 8 : index
    %54 = vector.load %arg2[%c0_35, %c16_36, %c8_37] : memref<8x32x32xf32, #tpu.memory_space<vmem>>, vector<8x8x8xf32>
    %cst_38 = arith.constant dense<0xFF800000> : vector<8x8xf32>
    %55 = vector.multi_reduction <maximumf>, %54, %cst_38 [0] : vector<8x8x8xf32> to vector<8x8xf32>
    %56 = vector.shape_cast %55 : vector<8x8xf32> to vector<1x8x8xf32>
    %cst_39 = arith.constant dense<0xFF800000> : vector<1xf32>
    %57 = vector.multi_reduction <maximumf>, %56, %cst_39 [1, 2] : vector<1x8x8xf32> to vector<1xf32>
    %58 = vector.shape_cast %57 : vector<1xf32> to vector<1x1x1xf32>
    %59 = vector.extract %58[0, 0, 0] : f32 from vector<1x1x1xf32>
    %60 = arith.cmpf oeq, %59, %0 : f32
    %61 = arith.subf %59, %0 : f32
    %62 = arith.select %60, %5, %61 : f32
    %cst_40 = arith.constant 1.000000e+00 : f32
    %63 = arith.divf %cst_40, %62 : f32
    %64 = vector.broadcast %0 : f32 to vector<8x8x8xf32>
    %65 = arith.subf %54, %64 : vector<8x8x8xf32>
    %66 = vector.broadcast %63 : f32 to vector<8x8x8xf32>
    %67 = arith.mulf %65, %66 : vector<8x8x8xf32>
    %c2 = arith.constant 2 : index
    %c0_41 = arith.constant 0 : index
    %c0_42 = arith.constant 0 : index
    %c0_43 = arith.constant 0 : index
    %68 = vector.load %arg4[%c2, %c0_41, %c0_42, %c0_43] : memref<4x8x8x8xf32, #tpu.memory_space<vmem>>, vector<1x8x8x8xf32>
    %69 = vector.shape_cast %68 : vector<1x8x8x8xf32> to vector<8x8x8xf32>
    %70 = vector.shape_cast %67 : vector<8x8x8xf32> to vector<1x8x8x8xf32>
    tpu.vector_store %arg4[%c2, %c0_41, %c0_42, %c0_43], %70 {strides = array<i32>} : memref<4x8x8x8xf32, #tpu.memory_space<vmem>>, vector<1x8x8x8xf32>,
    %c0_44 = arith.constant 0 : index
    %c16_45 = arith.constant 16 : index
    %c8_46 = arith.constant 8 : index
    %71 = vector.load %arg3[%c0_44, %c16_45, %c8_46] : memref<8x32x32xi8, #tpu.memory_space<vmem>>, vector<8x8x8xi8>
    %c0_i8_47 = arith.constant 0 : i8
    %72 = vector.broadcast %c0_i8_47 : i8 to vector<8x8x8xi8>
    %73 = arith.cmpi ne, %71, %72 : vector<8x8x8xi8>
    %74 = arith.extui %73 : vector<8x8x8xi1> to vector<8x8x8xi8>
    %c2_48 = arith.constant 2 : index
    %c0_49 = arith.constant 0 : index
    %c0_50 = arith.constant 0 : index
    %c0_51 = arith.constant 0 : index
    %75 = vector.load %arg5[%c2_48, %c0_49, %c0_50, %c0_51] : memref<4x8x8x8xi8, #tpu.memory_space<vmem>>, vector<1x8x8x8xi8>
    %76 = vector.shape_cast %75 : vector<1x8x8x8xi8> to vector<8x8x8xi8>
    %77 = vector.shape_cast %74 : vector<8x8x8xi8> to vector<1x8x8x8xi8>
    tpu.vector_store %arg5[%c2_48, %c0_49, %c0_50, %c0_51], %77 {strides = array<i32>} : memref<4x8x8x8xi8, #tpu.memory_space<vmem>>, vector<1x8x8x8xi8>,
    %c0_52 = arith.constant 0 : index
    %c16_53 = arith.constant 16 : index
    %c16_54 = arith.constant 16 : index
    %78 = vector.load %arg2[%c0_52, %c16_53, %c16_54] : memref<8x32x32xf32, #tpu.memory_space<vmem>>, vector<8x8x8xf32>
    %cst_55 = arith.constant dense<0xFF800000> : vector<8x8xf32>
    %79 = vector.multi_reduction <maximumf>, %78, %cst_55 [0] : vector<8x8x8xf32> to vector<8x8xf32>
    %80 = vector.shape_cast %79 : vector<8x8xf32> to vector<1x8x8xf32>
    %cst_56 = arith.constant dense<0xFF800000> : vector<1xf32>
    %81 = vector.multi_reduction <maximumf>, %80, %cst_56 [1, 2] : vector<1x8x8xf32> to vector<1xf32>
    %82 = vector.shape_cast %81 : vector<1xf32> to vector<1x1x1xf32>
    %83 = vector.extract %82[0, 0, 0] : f32 from vector<1x1x1xf32>
    %84 = arith.cmpf oeq, %83, %0 : f32
    %85 = arith.subf %83, %0 : f32
    %86 = arith.select %84, %5, %85 : f32
    %cst_57 = arith.constant 1.000000e+00 : f32
    %87 = arith.divf %cst_57, %86 : f32
    %88 = vector.broadcast %0 : f32 to vector<8x8x8xf32>
    %89 = arith.subf %78, %88 : vector<8x8x8xf32>
    %90 = vector.broadcast %87 : f32 to vector<8x8x8xf32>
    %91 = arith.mulf %89, %90 : vector<8x8x8xf32>
    %c3 = arith.constant 3 : index
    %c0_58 = arith.constant 0 : index
    %c0_59 = arith.constant 0 : index
    %c0_60 = arith.constant 0 : index
    %92 = vector.load %arg4[%c3, %c0_58, %c0_59, %c0_60] : memref<4x8x8x8xf32, #tpu.memory_space<vmem>>, vector<1x8x8x8xf32>
    %93 = vector.shape_cast %92 : vector<1x8x8x8xf32> to vector<8x8x8xf32>
    %94 = vector.shape_cast %91 : vector<8x8x8xf32> to vector<1x8x8x8xf32>
    tpu.vector_store %arg4[%c3, %c0_58, %c0_59, %c0_60], %94 {strides = array<i32>} : memref<4x8x8x8xf32, #tpu.memory_space<vmem>>, vector<1x8x8x8xf32>,
    %c0_61 = arith.constant 0 : index
    %c16_62 = arith.constant 16 : index
    %c16_63 = arith.constant 16 : index
    %95 = vector.load %arg3[%c0_61, %c16_62, %c16_63] : memref<8x32x32xi8, #tpu.memory_space<vmem>>, vector<8x8x8xi8>
    %c0_i8_64 = arith.constant 0 : i8
    %96 = vector.broadcast %c0_i8_64 : i8 to vector<8x8x8xi8>
    %97 = arith.cmpi ne, %95, %96 : vector<8x8x8xi8>
    %98 = arith.extui %97 : vector<8x8x8xi1> to vector<8x8x8xi8>
    %c3_65 = arith.constant 3 : index
    %c0_66 = arith.constant 0 : index
    %c0_67 = arith.constant 0 : index
    %c0_68 = arith.constant 0 : index
    %99 = vector.load %arg5[%c3_65, %c0_66, %c0_67, %c0_68] : memref<4x8x8x8xi8, #tpu.memory_space<vmem>>, vector<1x8x8x8xi8>
    %100 = vector.shape_cast %99 : vector<1x8x8x8xi8> to vector<8x8x8xi8>
    %101 = vector.shape_cast %98 : vector<8x8x8xi8> to vector<1x8x8x8xi8>
    tpu.vector_store %arg5[%c3_65, %c0_66, %c0_67, %c0_68], %101 {strides = array<i32>} : memref<4x8x8x8xi8, #tpu.memory_space<vmem>>, vector<1x8x8x8xi8>,
    return
  }
  func.func @transform_0(%arg0: i32) -> i32 {
    %c0_i32 = arith.constant 0 : i32
    %c0_i32_0 = arith.constant 0 : i32
    return %c0_i32 : i32
  }
  func.func @transform_1(%arg0: i32) -> (i32, i32, i32) {
    %c1_i32 = arith.constant 1 : i32
    %0 = arith.addi %arg0, %c1_i32 : i32
    %c0_i32 = arith.constant 0 : i32
    %c0_i32_0 = arith.constant 0 : i32
    %c0_i32_1 = arith.constant 0 : i32
    return %0, %c0_i32, %c0_i32_0 : i32, i32, i32
  }
  func.func @transform_2(%arg0: i32) -> (i32, i32, i32) {
    %c1_i32 = arith.constant 1 : i32
    %0 = arith.addi %arg0, %c1_i32 : i32
    %c0_i32 = arith.constant 0 : i32
    %c0_i32_0 = arith.constant 0 : i32
    %c0_i32_1 = arith.constant 0 : i32
    return %0, %c0_i32, %c0_i32_0 : i32, i32, i32
  }
  func.func @transform_3(%arg0: i32) -> (i32, i32, i32, i32) {
    %c0_i32 = arith.constant 0 : i32
    %c0_i32_0 = arith.constant 0 : i32
    %c0_i32_1 = arith.constant 0 : i32
    %c0_i32_2 = arith.constant 0 : i32
    return %arg0, %c0_i32, %c0_i32_0, %c0_i32_1 : i32, i32, i32, i32
  }
  func.func @transform_4(%arg0: i32) -> (i32, i32, i32, i32) {
    %c0_i32 = arith.constant 0 : i32
    %c0_i32_0 = arith.constant 0 : i32
    %c0_i32_1 = arith.constant 0 : i32
    %c0_i32_2 = arith.constant 0 : i32
    return %arg0, %c0_i32, %c0_i32_0, %c0_i32_1 : i32, i32, i32, i32
  }
}

</mosaic_0001>

<llo_original>
// kernel: data_preprocessing_forward.2
$region0: #{data_preprocessing_forward.2}
  #allocation0 [shape = 'u32[]', space=smem, size = 0x4, offset = 0x4, fixed_abs, tag = 'smem constant byte address 0x4 - core index']
  #allocation1 [shape = 'u32[144,128]{1,0:T(1,128)}', space=vmem, size = 0x12000, scoped, tag = 'internal scratch']
  %s0 = inlined_call_operand.hbm [shape: f32[32,32,32], index: 0, kind: input, shape index: {}]
  %s1 = inlined_call_operand.vmem [shape: f32[16,128], index: 1, kind: output, shape index: {0}]
  %s2 = inlined_call_operand.vmem [shape: f32[16,128], index: 2, kind: output, shape index: {1}]
  %3 = xla_tuple %s1, %s2
  %s4 = sld [smem:[#allocation0]]
  $region49: #{data_preprocessing_forward.2} parent=0
    _
  %s6 = ssub.s32 1, %s4
  %s7 = scalar_select 0, %s6, %s4
  $region1: #{data_preprocessing_forward.2} parent=0
    #allocation2 [shape = 'u8[524288]{0}', space=vmem, size = 0x80000, scoped, tag = 'input window, operand 0']
    #allocation3 [shape = 's32[2]{0}', space=sflag, size = 0x8, scoped, tag = 'scoped memory for data_preprocessing_forward.2']
    %8 = vsyncpa [#allocation3], 0
    %s9 = scalar_lea.sflag [#allocation3], 1
    %10 = vsyncpa %s9, 0
    loop: start=0, step=1, limit=4
    $region2: #{data_preprocessing_forward.2} parent=1 // loop_pre_header
      _
    $region3: #{data_preprocessing_forward.2} parent=1 // loop_header
      %s12 = sphi 0, %s16
      %p13 = scmp.ge.s32.totalorder %s12, 4
      %s22 = sphi 0, %s24
      %s25 = sphi 0, %s22
      %s26 = sphi 0, %s25
      %s42 = sphi 0, %s26
      %s48 = sphi 0, %s50
      %s51 = sphi 0, %s48
      %s52 = sphi 0, %s51
      %s68 = sphi 0, %s52
      %s74 = sphi 0, %s76
      %s77 = sphi 0, %s74
      %s78 = sphi 0, %s77
      %s94 = sphi 0, %s78
    $region4: #{data_preprocessing_forward.2} parent=1 // loop_header_branch
      %15 = sbr.rel (%p13) target = $region8
    $region5: #{data_preprocessing_forward.2} parent=1 // loop_body
      %s17 = ssub.s32 %s12, 1
      %s18 = ssub.s32 %s12, 2
      %s19 = sadd.s32 %s12, 1
      %s20 = ssub.s32 %s12, %s19
      %p21 = scmp.eq.s32.totalorder %s20, 0
      %s23 = sadd.s32 %s22, 1
      %s24 = scalar_select %p21, %s22, %s23
      %p27 = pneg %p21
      %p28 = scmp.eq.s32.totalorder %s12, 1
      %p29 = por %p27, %p28
      %p30 = scmp.ne.s32.totalorder %s22, %s25
      %p31 = scmp.eq.s32.totalorder %s12, 0
      %p32 = por %p30, %p31
      %p33 = scmp.ne.s32.totalorder %s22, %s25
      %p34 = scmp.eq.s32.totalorder %s17, 1
      %p35 = por %p33, %p34
      %p36 = scmp.ne.s32.totalorder %s25, %s26
      %p37 = scmp.eq.s32.totalorder %s17, 0
      %p38 = por %p36, %p37
      %p39 = scmp.ne.s32.totalorder %s25, %s26
      %p40 = scmp.eq.s32.totalorder %s18, 1
      %p41 = por %p39, %p40
      %p43 = scmp.ne.s32.totalorder %s26, %s42
      %p44 = scmp.eq.s32.totalorder %s18, 0
      %p45 = por %p43, %p44
      %s46 = ssub.s32 %s12, %s19
      %p47 = scmp.eq.s32.totalorder %s46, 0
      %s49 = sadd.s32 %s48, 1
      %s50 = scalar_select %p47, %s48, %s49
      %p53 = pneg %p47
      %p54 = scmp.eq.s32.totalorder %s12, 1
      %p55 = por %p53, %p54
      %p56 = scmp.ne.s32.totalorder %s48, %s51
      %p57 = scmp.eq.s32.totalorder %s12, 0
      %p58 = por %p56, %p57
      %p59 = scmp.ne.s32.totalorder %s48, %s51
      %p60 = scmp.eq.s32.totalorder %s17, 1
      %p61 = por %p59, %p60
      %p62 = scmp.ne.s32.totalorder %s51, %s52
      %p63 = scmp.eq.s32.totalorder %s17, 0
      %p64 = por %p62, %p63
      %p65 = scmp.ne.s32.totalorder %s51, %s52
      %p66 = scmp.eq.s32.totalorder %s18, 1
      %p67 = por %p65, %p66
      %p69 = scmp.ne.s32.totalorder %s52, %s68
      %p70 = scmp.eq.s32.totalorder %s18, 0
      %p71 = por %p69, %p70
      %s72 = ssub.s32 %s12, %s19
      %p73 = scmp.eq.s32.totalorder %s72, 0
      %s75 = sadd.s32 %s74, 1
      %s76 = scalar_select %p73, %s74, %s75
      %p79 = pneg %p73
      %p80 = scmp.eq.s32.totalorder %s12, 1
      %p81 = por %p79, %p80
      %p82 = scmp.ne.s32.totalorder %s74, %s77
      %p83 = scmp.eq.s32.totalorder %s12, 0
      %p84 = por %p82, %p83
      %p85 = scmp.ne.s32.totalorder %s74, %s77
      %p86 = scmp.eq.s32.totalorder %s17, 1
      %p87 = por %p85, %p86
      %p88 = scmp.ne.s32.totalorder %s77, %s78
      %p89 = scmp.eq.s32.totalorder %s17, 0
      %p90 = por %p88, %p89
      %p91 = scmp.ne.s32.totalorder %s77, %s78
      %p92 = scmp.eq.s32.totalorder %s18, 1
      %p93 = por %p91, %p92
      %p95 = scmp.ne.s32.totalorder %s78, %s94
      %p96 = scmp.eq.s32.totalorder %s18, 0
      %p97 = por %p95, %p96
      %p98 = scmp.le.s32.totalorder 1, %s12
      %p99 = scmp.lt.s32.totalorder %s12, 3
      %p100 = pnand %p98, %p99
      %p101 = pneg %p100
      // Predicated region
      $region9: #{data_preprocessing_forward.2} parent=5 // pred_check
        _
      $region10: #{data_preprocessing_forward.2} parent=5 // pred_check_branch
        %103 = sbr.rel (%p100) target = $region12
      $region11: #{data_preprocessing_forward.2} parent=5 // pred_region
        %s104 = ssub.s32 %s12, 1
      $region12: #{data_preprocessing_forward.2} parent=5 // pred_fallthru
        _
      %p105 = scmp.lt.s32.totalorder %s12, 2
      // Predicated region
      $region13: #{data_preprocessing_forward.2} parent=5 // pred_check
        %p106 = pneg %p105
      $region14: #{data_preprocessing_forward.2} parent=5 // pred_check_branch
        %108 = sbr.rel (%p106) target = $region16
      $region15: #{data_preprocessing_forward.2} parent=5 // pred_region
        // Predicated region
        $region17: #{data_preprocessing_forward.2} parent=15 // pred_check
          %p109 = pneg %p32
        $region18: #{data_preprocessing_forward.2} parent=15 // pred_check_branch
          %111 = sbr.rel (%p109) target = $region20
        $region19: #{data_preprocessing_forward.2} parent=15 // pred_region
          %s112 = sand.u32 %s22, 1
          %s113 = scalar_lea.sflag [#allocation3], %s112
          %s114 = sand.u32 %s22, 1
          %s115 = smul.addr %s114, 512
          %s116 = scalar_lea.vmem [#allocation2], %s115
          %s117 = smul.u32 16, %s12
          %s119 = ssub.s32 8192, 8192
          %120 = vsyncadd %s113, %s119
          %s121 = smul.addr %s117, 4
          %s122 = smul.addr %s121, 128
          %s123 = scalar_lea.hbm %s0, %s122
          %s124 = sshll.u32 %s116, 4
          %s125 = int_to_ptr.vmem [resolvable:$true] %s124
          %130 = dma.hbm_to_vmem [thread:$0]  %s123, 8192, %s125, %s113, 128, 128, 8
        $region20: #{data_preprocessing_forward.2} parent=15 // pred_fallthru
          _
      $region16: #{data_preprocessing_forward.2} parent=5 // pred_fallthru
        _
      %p131 = scmp.le.s32.totalorder 1, %s12
      %p132 = scmp.lt.s32.totalorder %s12, 3
      %p133 = pnand %p131, %p132
      %p134 = pneg %p133
      // Predicated region
      $region21: #{data_preprocessing_forward.2} parent=5 // pred_check
        _
      $region22: #{data_preprocessing_forward.2} parent=5 // pred_check_branch
        %136 = sbr.rel (%p133) target = $region24
      $region23: #{data_preprocessing_forward.2} parent=5 // pred_region
        %s137 = ssub.s32 %s12, 1
        %s138 = sand.u32 %s25, 1
        %s139 = scalar_lea.sflag [#allocation3], %s138
        %s140 = sand.u32 %s25, 1
        %s141 = smul.addr %s140, 512
        %s142 = scalar_lea.vmem [#allocation2], %s141
        // Predicated region
        $region25: #{data_preprocessing_forward.2} parent=23 // pred_check
          %p143 = pneg %p38
        $region26: #{data_preprocessing_forward.2} parent=23 // pred_check_branch
          %145 = sbr.rel (%p143) target = $region28
        $region27: #{data_preprocessing_forward.2} parent=23 // pred_region
          %146 = dma.done %s139, 8192
        $region28: #{data_preprocessing_forward.2} parent=23 // pred_fallthru
          _
        %s147 = sand.u32 %s25, 1
        %s148 = scalar_lea.sflag [#allocation3], %s147
        %s149 = sand.u32 %s25, 1
        %s150 = smul.addr %s149, 512
        %s151 = scalar_lea.vmem [#allocation2], %s150
        %p152 = pneg %p38
        %p153 = pneg %p35
        %p154 = pneg %p64
        %p155 = pneg %p61
        %p156 = scmp.lt.s32.totalorder %s17, 1
        %s157 = scalar_select %p156, %s17, 1
        %s158 = smul.addr %s157, 8
        %s159 = scalar_lea.vmem %s1, %s158
        %p160 = pneg %p90
        %p161 = pneg %p87
        %p162 = scmp.lt.s32.totalorder %s17, 1
        %s163 = scalar_select %p162, %s17, 1
        %s164 = smul.addr %s163, 8
        %s165 = scalar_lea.vmem %s2, %s164
        %s166 = smul.u32 16, %s17
        %p167 = scmp.lt.s32.totalorder %s17, 1
        %s168 = scalar_select %p167, %s17, 1
        %s169 = smul.addr %s168, 8
        %s170 = scalar_lea.vmem %s1, %s169
        %p171 = scmp.lt.s32.totalorder %s17, 1
        %s172 = scalar_select %p171, %s17, 1
        %s173 = smul.addr %s172, 8
        %s174 = scalar_lea.vmem %s2, %s173
        %v175 = vld [vmem:[%s142] sm:$0xff]
        %v176 = vld [vmem:[%s142 + $0x8] sm:$0xff]
        %v177 = vld [vmem:[%s142 + $0x10] sm:$0xff]
        %v178 = vld [vmem:[%s142 + $0x18] sm:$0xff]
        %v179 = vld [vmem:[%s142 + $0x20] sm:$0xff]
        %v180 = vld [vmem:[%s142 + $0x28] sm:$0xff]
        %v181 = vld [vmem:[%s142 + $0x30] sm:$0xff]
        %v182 = vld [vmem:[%s142 + $0x38] sm:$0xff]
        %v183 = vld [vmem:[%s142 + $0x40] sm:$0xff]
        %v184 = vld [vmem:[%s142 + $0x48] sm:$0xff]
        %v185 = vld [vmem:[%s142 + $0x50] sm:$0xff]
        %v186 = vld [vmem:[%s142 + $0x58] sm:$0xff]
        %v187 = vld [vmem:[%s142 + $0x60] sm:$0xff]
        %v188 = vld [vmem:[%s142 + $0x68] sm:$0xff]
        %v189 = vld [vmem:[%s142 + $0x70] sm:$0xff]
        %v190 = vld [vmem:[%s142 + $0x78] sm:$0xff]
        %v191 = vld [vmem:[%s142 + $0x80] sm:$0xff]
        %v192 = vld [vmem:[%s142 + $0x88] sm:$0xff]
        %v193 = vld [vmem:[%s142 + $0x90] sm:$0xff]
        %v194 = vld [vmem:[%s142 + $0x98] sm:$0xff]
        %v195 = vld [vmem:[%s142 + $0xa0] sm:$0xff]
        %v196 = vld [vmem:[%s142 + $0xa8] sm:$0xff]
        %v197 = vld [vmem:[%s142 + $0xb0] sm:$0xff]
        %v198 = vld [vmem:[%s142 + $0xb8] sm:$0xff]
        %v199 = vld [vmem:[%s142 + $0xc0] sm:$0xff]
        %v200 = vld [vmem:[%s142 + $0xc8] sm:$0xff]
        %v201 = vld [vmem:[%s142 + $0xd0] sm:$0xff]
        %v202 = vld [vmem:[%s142 + $0xd8] sm:$0xff]
        %v203 = vld [vmem:[%s142 + $0xe0] sm:$0xff]
        %v204 = vld [vmem:[%s142 + $0xe8] sm:$0xff]
        %v205 = vld [vmem:[%s142 + $0xf0] sm:$0xff]
        %v206 = vld [vmem:[%s142 + $0xf8] sm:$0xff]
        %v207 = vld [vmem:[%s142 + $0x100] sm:$0xff]
        %v208 = vld [vmem:[%s142 + $0x108] sm:$0xff]
        %v209 = vld [vmem:[%s142 + $0x110] sm:$0xff]
        %v210 = vld [vmem:[%s142 + $0x118] sm:$0xff]
        %v211 = vld [vmem:[%s142 + $0x120] sm:$0xff]
        %v212 = vld [vmem:[%s142 + $0x128] sm:$0xff]
        %v213 = vld [vmem:[%s142 + $0x130] sm:$0xff]
        %v214 = vld [vmem:[%s142 + $0x138] sm:$0xff]
        %v215 = vld [vmem:[%s142 + $0x140] sm:$0xff]
        %v216 = vld [vmem:[%s142 + $0x148] sm:$0xff]
        %v217 = vld [vmem:[%s142 + $0x150] sm:$0xff]
        %v218 = vld [vmem:[%s142 + $0x158] sm:$0xff]
        %v219 = vld [vmem:[%s142 + $0x160] sm:$0xff]
        %v220 = vld [vmem:[%s142 + $0x168] sm:$0xff]
        %v221 = vld [vmem:[%s142 + $0x170] sm:$0xff]
        %v222 = vld [vmem:[%s142 + $0x178] sm:$0xff]
        %v223 = vld [vmem:[%s142 + $0x180] sm:$0xff]
        %v224 = vld [vmem:[%s142 + $0x188] sm:$0xff]
        %v225 = vld [vmem:[%s142 + $0x190] sm:$0xff]
        %v226 = vld [vmem:[%s142 + $0x198] sm:$0xff]
        %v227 = vld [vmem:[%s142 + $0x1a0] sm:$0xff]
        %v228 = vld [vmem:[%s142 + $0x1a8] sm:$0xff]
        %v229 = vld [vmem:[%s142 + $0x1b0] sm:$0xff]
        %v230 = vld [vmem:[%s142 + $0x1b8] sm:$0xff]
        %v231 = vld [vmem:[%s142 + $0x1c0] sm:$0xff]
        %v232 = vld [vmem:[%s142 + $0x1c8] sm:$0xff]
        %v233 = vld [vmem:[%s142 + $0x1d0] sm:$0xff]
        %v234 = vld [vmem:[%s142 + $0x1d8] sm:$0xff]
        %v235 = vld [vmem:[%s142 + $0x1e0] sm:$0xff]
        %v236 = vld [vmem:[%s142 + $0x1e8] sm:$0xff]
        %v237 = vld [vmem:[%s142 + $0x1f0] sm:$0xff]
        %v238 = vld [vmem:[%s142 + $0x1f8] sm:$0xff]
        %vm239 = vcmask 261120
        %v240 = vsel %vm239, %v175, inf
        %v241 = vsel %vm239, %v179, inf
        %v242 = vmin.f32 %v240, %v241
        %v243 = vsel %vm239, %v183, inf
        %v244 = vmin.f32 %v242, %v243
        %v245 = vsel %vm239, %v187, inf
        %v246 = vmin.f32 %v244, %v245
        %v247 = vsel %vm239, %v191, inf
        %v248 = vmin.f32 %v246, %v247
        %v249 = vsel %vm239, %v195, inf
        %v250 = vmin.f32 %v248, %v249
        %v251 = vsel %vm239, %v199, inf
        %v252 = vmin.f32 %v250, %v251
        %v253 = vsel %vm239, %v203, inf
        %v254 = vmin.f32 %v252, %v253
        %v255 = vsel %vm239, %v207, inf
        %v256 = vmin.f32 %v254, %v255
        %v257 = vsel %vm239, %v211, inf
        %v258 = vmin.f32 %v256, %v257
        %v259 = vsel %vm239, %v215, inf
        %v260 = vmin.f32 %v258, %v259
        %v261 = vsel %vm239, %v219, inf
        %v262 = vmin.f32 %v260, %v261
        %v263 = vsel %vm239, %v223, inf
        %v264 = vmin.f32 %v262, %v263
        %v265 = vsel %vm239, %v227, inf
        %v266 = vmin.f32 %v264, %v265
        %v267 = vsel %vm239, %v231, inf
        %v268 = vmin.f32 %v266, %v267
        %v269 = vsel %vm239, %v235, inf
        %v270 = vmin.f32 %v268, %v269
        %v271 = vsel %vm239, %v176, inf
        %v272 = vsel %vm239, %v180, inf
        %v273 = vmin.f32 %v271, %v272
        %v274 = vsel %vm239, %v184, inf
        %v275 = vmin.f32 %v273, %v274
        %v276 = vsel %vm239, %v188, inf
        %v277 = vmin.f32 %v275, %v276
        %v278 = vsel %vm239, %v192, inf
        %v279 = vmin.f32 %v277, %v278
        %v280 = vsel %vm239, %v196, inf
        %v281 = vmin.f32 %v279, %v280
        %v282 = vsel %vm239, %v200, inf
        %v283 = vmin.f32 %v281, %v282
        %v284 = vsel %vm239, %v204, inf
        %v285 = vmin.f32 %v283, %v284
        %v286 = vsel %vm239, %v208, inf
        %v287 = vmin.f32 %v285, %v286
        %v288 = vsel %vm239, %v212, inf
        %v289 = vmin.f32 %v287, %v288
        %v290 = vsel %vm239, %v216, inf
        %v291 = vmin.f32 %v289, %v290
        %v292 = vsel %vm239, %v220, inf
        %v293 = vmin.f32 %v291, %v292
        %v294 = vsel %vm239, %v224, inf
        %v295 = vmin.f32 %v293, %v294
        %v296 = vsel %vm239, %v228, inf
        %v297 = vmin.f32 %v295, %v296
        %v298 = vsel %vm239, %v232, inf
        %v299 = vmin.f32 %v297, %v298
        %v300 = vsel %vm239, %v236, inf
        %v301 = vmin.f32 %v299, %v300
        %v302 = vsel %vm239, %v177, inf
        %v303 = vsel %vm239, %v181, inf
        %v304 = vmin.f32 %v302, %v303
        %v305 = vsel %vm239, %v185, inf
        %v306 = vmin.f32 %v304, %v305
        %v307 = vsel %vm239, %v189, inf
        %v308 = vmin.f32 %v306, %v307
        %v309 = vsel %vm239, %v193, inf
        %v310 = vmin.f32 %v308, %v309
        %v311 = vsel %vm239, %v197, inf
        %v312 = vmin.f32 %v310, %v311
        %v313 = vsel %vm239, %v201, inf
        %v314 = vmin.f32 %v312, %v313
        %v315 = vsel %vm239, %v205, inf
        %v316 = vmin.f32 %v314, %v315
        %v317 = vsel %vm239, %v209, inf
        %v318 = vmin.f32 %v316, %v317
        %v319 = vsel %vm239, %v213, inf
        %v320 = vmin.f32 %v318, %v319
        %v321 = vsel %vm239, %v217, inf
        %v322 = vmin.f32 %v320, %v321
        %v323 = vsel %vm239, %v221, inf
        %v324 = vmin.f32 %v322, %v323
        %v325 = vsel %vm239, %v225, inf
        %v326 = vmin.f32 %v324, %v325
        %v327 = vsel %vm239, %v229, inf
        %v328 = vmin.f32 %v326, %v327
        %v329 = vsel %vm239, %v233, inf
        %v330 = vmin.f32 %v328, %v329
        %v331 = vsel %vm239, %v237, inf
        %v332 = vmin.f32 %v330, %v331
        %v333 = vsel %vm239, %v178, inf
        %v334 = vsel %vm239, %v182, inf
        %v335 = vmin.f32 %v333, %v334
        %v336 = vsel %vm239, %v186, inf
        %v337 = vmin.f32 %v335, %v336
        %v338 = vsel %vm239, %v190, inf
        %v339 = vmin.f32 %v337, %v338
        %v340 = vsel %vm239, %v194, inf
        %v341 = vmin.f32 %v339, %v340
        %v342 = vsel %vm239, %v198, inf
        %v343 = vmin.f32 %v341, %v342
        %v344 = vsel %vm239, %v202, inf
        %v345 = vmin.f32 %v343, %v344
        %v346 = vsel %vm239, %v206, inf
        %v347 = vmin.f32 %v345, %v346
        %v348 = vsel %vm239, %v210, inf
        %v349 = vmin.f32 %v347, %v348
        %v350 = vsel %vm239, %v214, inf
        %v351 = vmin.f32 %v349, %v350
        %v352 = vsel %vm239, %v218, inf
        %v353 = vmin.f32 %v351, %v352
        %v354 = vsel %vm239, %v222, inf
        %v355 = vmin.f32 %v353, %v354
        %v356 = vsel %vm239, %v226, inf
        %v357 = vmin.f32 %v355, %v356
        %v358 = vsel %vm239, %v230, inf
        %v359 = vmin.f32 %v357, %v358
        %v360 = vsel %vm239, %v234, inf
        %v361 = vmin.f32 %v359, %v360
        %v362 = vsel %vm239, %v238, inf
        %v363 = vmin.f32 %v361, %v362
        %v364 = vsel %vm239, %v270, inf
        %v365 = vsel %vm239, %v301, inf
        %v366 = vsel %vm239, %v332, inf
        %v367 = vsel %vm239, %v363, inf
        %v368 = vmin.f32 %v364, %v365
        %v369 = vmin.f32 %v366, %v367
        %v370 = vmin.f32 %v368, %v369
        %371 = vmin.xlane.f32.xlu0 %v370
        %v372 = vpop.xlane.xlu0 %371
        %v373 = vrot.slane %v372, 4
        %v374 = vmin.f32 %v372, %v373
        %v375 = vrot.slane %v374, 2
        %v376 = vmin.f32 %v374, %v375
        %v377 = vrot.slane %v376, 1
        %v378 = vmin.f32 %v376, %v377
        %s379 = vtos %v378
        %v380 = vstv %s379
        %381 = vst [vmem:[%s170] sm:$0xff] %v380
        %v382 = vsel %vm239, %v175, -inf
        %v383 = vsel %vm239, %v179, -inf
        %v384 = vmax.f32 %v382, %v383
        %v385 = vsel %vm239, %v183, -inf
        %v386 = vmax.f32 %v384, %v385
        %v387 = vsel %vm239, %v187, -inf
        %v388 = vmax.f32 %v386, %v387
        %v389 = vsel %vm239, %v191, -inf
        %v390 = vmax.f32 %v388, %v389
        %v391 = vsel %vm239, %v195, -inf
        %v392 = vmax.f32 %v390, %v391
        %v393 = vsel %vm239, %v199, -inf
        %v394 = vmax.f32 %v392, %v393
        %v395 = vsel %vm239, %v203, -inf
        %v396 = vmax.f32 %v394, %v395
        %v397 = vsel %vm239, %v207, -inf
        %v398 = vmax.f32 %v396, %v397
        %v399 = vsel %vm239, %v211, -inf
        %v400 = vmax.f32 %v398, %v399
        %v401 = vsel %vm239, %v215, -inf
        %v402 = vmax.f32 %v400, %v401
        %v403 = vsel %vm239, %v219, -inf
        %v404 = vmax.f32 %v402, %v403
        %v405 = vsel %vm239, %v223, -inf
        %v406 = vmax.f32 %v404, %v405
        %v407 = vsel %vm239, %v227, -inf
        %v408 = vmax.f32 %v406, %v407
        %v409 = vsel %vm239, %v231, -inf
        %v410 = vmax.f32 %v408, %v409
        %v411 = vsel %vm239, %v235, -inf
        %v412 = vmax.f32 %v410, %v411
        %v413 = vsel %vm239, %v176, -inf
        %v414 = vsel %vm239, %v180, -inf
        %v415 = vmax.f32 %v413, %v414
        %v416 = vsel %vm239, %v184, -inf
        %v417 = vmax.f32 %v415, %v416
        %v418 = vsel %vm239, %v188, -inf
        %v419 = vmax.f32 %v417, %v418
        %v420 = vsel %vm239, %v192, -inf
        %v421 = vmax.f32 %v419, %v420
        %v422 = vsel %vm239, %v196, -inf
        %v423 = vmax.f32 %v421, %v422
        %v424 = vsel %vm239, %v200, -inf
        %v425 = vmax.f32 %v423, %v424
        %v426 = vsel %vm239, %v204, -inf
        %v427 = vmax.f32 %v425, %v426
        %v428 = vsel %vm239, %v208, -inf
        %v429 = vmax.f32 %v427, %v428
        %v430 = vsel %vm239, %v212, -inf
        %v431 = vmax.f32 %v429, %v430
        %v432 = vsel %vm239, %v216, -inf
        %v433 = vmax.f32 %v431, %v432
        %v434 = vsel %vm239, %v220, -inf
        %v435 = vmax.f32 %v433, %v434
        %v436 = vsel %vm239, %v224, -inf
        %v437 = vmax.f32 %v435, %v436
        %v438 = vsel %vm239, %v228, -inf
        %v439 = vmax.f32 %v437, %v438
        %v440 = vsel %vm239, %v232, -inf
        %v441 = vmax.f32 %v439, %v440
        %v442 = vsel %vm239, %v236, -inf
        %v443 = vmax.f32 %v441, %v442
        %v444 = vsel %vm239, %v177, -inf
        %v445 = vsel %vm239, %v181, -inf
        %v446 = vmax.f32 %v444, %v445
        %v447 = vsel %vm239, %v185, -inf
        %v448 = vmax.f32 %v446, %v447
        %v449 = vsel %vm239, %v189, -inf
        %v450 = vmax.f32 %v448, %v449
        %v451 = vsel %vm239, %v193, -inf
        %v452 = vmax.f32 %v450, %v451
        %v453 = vsel %vm239, %v197, -inf
        %v454 = vmax.f32 %v452, %v453
        %v455 = vsel %vm239, %v201, -inf
        %v456 = vmax.f32 %v454, %v455
        %v457 = vsel %vm239, %v205, -inf
        %v458 = vmax.f32 %v456, %v457
        %v459 = vsel %vm239, %v209, -inf
        %v460 = vmax.f32 %v458, %v459
        %v461 = vsel %vm239, %v213, -inf
        %v462 = vmax.f32 %v460, %v461
        %v463 = vsel %vm239, %v217, -inf
        %v464 = vmax.f32 %v462, %v463
        %v465 = vsel %vm239, %v221, -inf
        %v466 = vmax.f32 %v464, %v465
        %v467 = vsel %vm239, %v225, -inf
        %v468 = vmax.f32 %v466, %v467
        %v469 = vsel %vm239, %v229, -inf
        %v470 = vmax.f32 %v468, %v469
        %v471 = vsel %vm239, %v233, -inf
        %v472 = vmax.f32 %v470, %v471
        %v473 = vsel %vm239, %v237, -inf
        %v474 = vmax.f32 %v472, %v473
        %v475 = vsel %vm239, %v178, -inf
        %v476 = vsel %vm239, %v182, -inf
        %v477 = vmax.f32 %v475, %v476
        %v478 = vsel %vm239, %v186, -inf
        %v479 = vmax.f32 %v477, %v478
        %v480 = vsel %vm239, %v190, -inf
        %v481 = vmax.f32 %v479, %v480
        %v482 = vsel %vm239, %v194, -inf
        %v483 = vmax.f32 %v481, %v482
        %v484 = vsel %vm239, %v198, -inf
        %v485 = vmax.f32 %v483, %v484
        %v486 = vsel %vm239, %v202, -inf
        %v487 = vmax.f32 %v485, %v486
        %v488 = vsel %vm239, %v206, -inf
        %v489 = vmax.f32 %v487, %v488
        %v490 = vsel %vm239, %v210, -inf
        %v491 = vmax.f32 %v489, %v490
        %v492 = vsel %vm239, %v214, -inf
        %v493 = vmax.f32 %v491, %v492
        %v494 = vsel %vm239, %v218, -inf
        %v495 = vmax.f32 %v493, %v494
        %v496 = vsel %vm239, %v222, -inf
        %v497 = vmax.f32 %v495, %v496
        %v498 = vsel %vm239, %v226, -inf
        %v499 = vmax.f32 %v497, %v498
        %v500 = vsel %vm239, %v230, -inf
        %v501 = vmax.f32 %v499, %v500
        %v502 = vsel %vm239, %v234, -inf
        %v503 = vmax.f32 %v501, %v502
        %v504 = vsel %vm239, %v238, -inf
        %v505 = vmax.f32 %v503, %v504
        %v506 = vsel %vm239, %v412, -inf
        %v507 = vsel %vm239, %v443, -inf
        %v508 = vsel %vm239, %v474, -inf
        %v509 = vsel %vm239, %v505, -inf
        %v510 = vmax.f32 %v506, %v507
        %v511 = vmax.f32 %v508, %v509
        %v512 = vmax.f32 %v510, %v511
        %513 = vmax.xlane.f32.xlu0 %v512
        %v514 = vpop.xlane.xlu0 %513
        %v515 = vrot.slane %v514, 4
        %v516 = vmax.f32 %v514, %v515
        %v517 = vrot.slane %v516, 2
        %v518 = vmax.f32 %v516, %v517
        %v519 = vrot.slane %v518, 1
        %v520 = vmax.f32 %v518, %v519
        %s521 = vtos %v520
        %v522 = vstv %s521
        %523 = vst [vmem:[%s174] sm:$0xff] %v522
        %p524 = scmp.lt.s32.totalorder %s17, 1
        %s525 = scalar_select %p524, %s17, 1
        %s526 = smul.addr %s525, 8
        %s527 = scalar_lea.vmem %s1, %s526
        %p528 = scmp.lt.s32.totalorder %s17, 1
        %s529 = scalar_select %p528, %s17, 1
        %s530 = smul.addr %s529, 8
        %s531 = scalar_lea.vmem %s2, %s530
        // Predicated region
        $region29: #{data_preprocessing_forward.2} parent=23 // pred_check
          %p532 = pneg %p61
        $region30: #{data_preprocessing_forward.2} parent=23 // pred_check_branch
          %534 = sbr.rel (%p532) target = $region32
        $region31: #{data_preprocessing_forward.2} parent=23 // pred_region
          _
        $region32: #{data_preprocessing_forward.2} parent=23 // pred_fallthru
          _
        // Predicated region
        $region33: #{data_preprocessing_forward.2} parent=23 // pred_check
          %p535 = pneg %p87
        $region34: #{data_preprocessing_forward.2} parent=23 // pred_check_branch
          %537 = sbr.rel (%p535) target = $region36
        $region35: #{data_preprocessing_forward.2} parent=23 // pred_region
          _
        $region36: #{data_preprocessing_forward.2} parent=23 // pred_fallthru
          _
      $region24: #{data_preprocessing_forward.2} parent=5 // pred_fallthru
        _
      %p538 = scmp.le.s32.totalorder 2, %s12
      // Predicated region
      $region37: #{data_preprocessing_forward.2} parent=5 // pred_check
        %p539 = pneg %p538
      $region38: #{data_preprocessing_forward.2} parent=5 // pred_check_branch
        %541 = sbr.rel (%p539) target = $region40
      $region39: #{data_preprocessing_forward.2} parent=5 // pred_region
        %s542 = ssub.s32 %s12, 2
        // Predicated region
        $region41: #{data_preprocessing_forward.2} parent=39 // pred_check
          %p543 = pneg %p67
        $region42: #{data_preprocessing_forward.2} parent=39 // pred_check_branch
          %545 = sbr.rel (%p543) target = $region44
        $region43: #{data_preprocessing_forward.2} parent=39 // pred_region
          %p546 = scmp.lt.s32.totalorder %s18, 1
          %s547 = scalar_select %p546, %s18, 1
          %s548 = smul.addr %s547, 8
          %s549 = scalar_lea.vmem %s1, %s548
        $region44: #{data_preprocessing_forward.2} parent=39 // pred_fallthru
          _
        // Predicated region
        $region45: #{data_preprocessing_forward.2} parent=39 // pred_check
          %p550 = pneg %p93
        $region46: #{data_preprocessing_forward.2} parent=39 // pred_check_branch
          %552 = sbr.rel (%p550) target = $region48
        $region47: #{data_preprocessing_forward.2} parent=39 // pred_region
          %p553 = scmp.lt.s32.totalorder %s18, 1
          %s554 = scalar_select %p553, %s18, 1
          %s555 = smul.addr %s554, 8
          %s556 = scalar_lea.vmem %s2, %s555
        $region48: #{data_preprocessing_forward.2} parent=39 // pred_fallthru
          _
      $region40: #{data_preprocessing_forward.2} parent=5 // pred_fallthru
        _
    $region6: #{data_preprocessing_forward.2} parent=1 // loop_footer
      %s16 = sadd.s32 1, %s12
    $region7: #{data_preprocessing_forward.2} parent=1 // loop_footer_branch
      %11 = sbr.rel target = $region3
    $region8: #{data_preprocessing_forward.2} parent=1 // loop_exit
      _
    %557 = vsyncpa [#allocation3], 1
    %s558 = scalar_lea.sflag [#allocation3], 1
    %559 = vsyncpa %s558, 1

// kernel: data_preprocessing_forward.3
$region0: #{data_preprocessing_forward.3}
  #allocation0 [shape = 'u32[]', space=smem, size = 0x4, offset = 0x4, fixed_abs, tag = 'smem constant byte address 0x4 - core index']
  #allocation1 [shape = 'u32[144,128]{1,0:T(1,128)}', space=vmem, size = 0x12000, scoped, tag = 'internal scratch']
  %s0 = inlined_call_operand.vmem [shape: f32[2], index: 0, kind: input, shape index: {}]
  %s1 = inlined_call_operand.vmem [shape: f32[32,32,32], index: 1, kind: input, shape index: {}]
  %s2 = inlined_call_operand.hbm [shape: u8[32,32,32], index: 2, kind: input, shape index: {}]
  %s3 = inlined_call_operand.hbm [shape: f32[8,8,8,8], index: 3, kind: output, shape index: {0}]
  %s4 = inlined_call_operand.hbm [shape: u8[8,8,8,8], index: 4, kind: output, shape index: {1}]
  %5 = xla_tuple %s3, %s4
  %s6 = sld [smem:[#allocation0]]
  $region61: #{data_preprocessing_forward.3} parent=0
    _
  %s8 = ssub.s32 1, %s6
  %s9 = scalar_select 0, %s8, %s6
  $region1: #{data_preprocessing_forward.3} parent=0
    #allocation2 [shape = 'u8[512]{0}', space=smem, size = 0x200, scoped, tag = 'input window, operand 0, single buffered']
    #allocation3 [shape = 's32[2]{0}', space=sflag, size = 0x8, scoped, tag = 'scoped memory for data_preprocessing_forward.3']
    #allocation4 [shape = 's32[2]{0}', space=sflag, size = 0x8, scoped, tag = 'scoped memory for data_preprocessing_forward.3']
    #allocation5 [shape = 's32[2]{0}', space=sflag, size = 0x8, scoped, tag = 'scoped memory for data_preprocessing_forward.3']
    #allocation6 [shape = 'u8[65536]{0}', space=vmem, size = 0x10000, scoped, tag = 'input window, operand 2']
    #allocation7 [shape = 'u8[262144]{0}', space=vmem, size = 0x40000, scoped, tag = 'output window, operand 0']
    #allocation8 [shape = 'u8[65536]{0}', space=vmem, size = 0x10000, scoped, tag = 'output window, operand 1']
    #allocation9 [shape = 's32[2]{0}', space=sflag, size = 0x8, scoped, tag = 'scoped memory for data_preprocessing_forward.3']
    %10 = vsyncpa [#allocation5], 0
    %11 = vsyncpa [#allocation3], 0
    %s12 = scalar_lea.sflag [#allocation3], 1
    %13 = vsyncpa %s12, 0
    %14 = vsyncpa [#allocation4], 0
    %s15 = scalar_lea.sflag [#allocation4], 1
    %16 = vsyncpa %s15, 0
    %17 = vsyncpa [#allocation9], 0
    %s18 = scalar_lea.sflag [#allocation9], 1
    %19 = vsyncpa %s18, 0
    loop: start=0, step=1, limit=4
    $region2: #{data_preprocessing_forward.3} parent=1 // loop_pre_header
      _
    $region3: #{data_preprocessing_forward.3} parent=1 // loop_header
      %s21 = sphi 0, %s25
      %p22 = scmp.ge.s32.totalorder %s21, 4
      %s29 = sphi 0, %s29
      %s31 = sphi 0, %s29
      %s32 = sphi 0, %s31
      %s46 = sphi 0, %s32
      %s54 = sphi 0, %s56
      %s57 = sphi 0, %s54
      %s58 = sphi 0, %s57
      %s74 = sphi 0, %s58
      %s82 = sphi 0, %s84
      %s85 = sphi 0, %s82
      %s86 = sphi 0, %s85
      %s102 = sphi 0, %s86
      %s108 = sphi 0, %s110
      %s111 = sphi 0, %s108
      %s112 = sphi 0, %s111
      %s128 = sphi 0, %s112
      %s134 = sphi 0, %s136
      %s137 = sphi 0, %s134
      %s138 = sphi 0, %s137
      %s154 = sphi 0, %s138
    $region4: #{data_preprocessing_forward.3} parent=1 // loop_header_branch
      %24 = sbr.rel (%p22) target = $region8
    $region5: #{data_preprocessing_forward.3} parent=1 // loop_body
      %s26 = ssub.s32 %s21, 1
      %s27 = ssub.s32 %s21, 2
      %s28 = sadd.s32 %s21, 1
      %s30 = sadd.s32 %s29, 1
      %p33 = scmp.eq.s32.totalorder %s21, 1
      %p34 = scmp.ne.s32.totalorder %s29, %s31
      %p35 = scmp.eq.s32.totalorder %s21, 0
      %p36 = por %p34, %p35
      %p37 = scmp.ne.s32.totalorder %s29, %s31
      %p38 = scmp.eq.s32.totalorder %s26, 1
      %p39 = por %p37, %p38
      %p40 = scmp.ne.s32.totalorder %s31, %s32
      %p41 = scmp.eq.s32.totalorder %s26, 0
      %p42 = por %p40, %p41
      %p43 = scmp.ne.s32.totalorder %s31, %s32
      %p44 = scmp.eq.s32.totalorder %s27, 1
      %p45 = por %p43, %p44
      %p47 = scmp.ne.s32.totalorder %s32, %s46
      %p48 = scmp.eq.s32.totalorder %s27, 0
      %p49 = por %p47, %p48
      %s50 = sadd.s32 %s21, 1
      %s51 = sadd.s32 %s28, 1
      %s52 = ssub.s32 %s50, %s51
      %p53 = scmp.eq.s32.totalorder %s52, 0
      %s55 = sadd.s32 %s54, 1
      %s56 = scalar_select %p53, %s54, %s55
      %p59 = pneg %p53
      %p60 = scmp.eq.s32.totalorder %s21, 1
      %p61 = por %p59, %p60
      %p62 = scmp.ne.s32.totalorder %s54, %s57
      %p63 = scmp.eq.s32.totalorder %s21, 0
      %p64 = por %p62, %p63
      %p65 = scmp.ne.s32.totalorder %s54, %s57
      %p66 = scmp.eq.s32.totalorder %s26, 1
      %p67 = por %p65, %p66
      %p68 = scmp.ne.s32.totalorder %s57, %s58
      %p69 = scmp.eq.s32.totalorder %s26, 0
      %p70 = por %p68, %p69
      %p71 = scmp.ne.s32.totalorder %s57, %s58
      %p72 = scmp.eq.s32.totalorder %s27, 1
      %p73 = por %p71, %p72
      %p75 = scmp.ne.s32.totalorder %s58, %s74
      %p76 = scmp.eq.s32.totalorder %s27, 0
      %p77 = por %p75, %p76
      %s78 = sadd.s32 %s21, 1
      %s79 = sadd.s32 %s28, 1
      %s80 = ssub.s32 %s78, %s79
      %p81 = scmp.eq.s32.totalorder %s80, 0
      %s83 = sadd.s32 %s82, 1
      %s84 = scalar_select %p81, %s82, %s83
      %p87 = pneg %p81
      %p88 = scmp.eq.s32.totalorder %s21, 1
      %p89 = por %p87, %p88
      %p90 = scmp.ne.s32.totalorder %s82, %s85
      %p91 = scmp.eq.s32.totalorder %s21, 0
      %p92 = por %p90, %p91
      %p93 = scmp.ne.s32.totalorder %s82, %s85
      %p94 = scmp.eq.s32.totalorder %s26, 1
      %p95 = por %p93, %p94
      %p96 = scmp.ne.s32.totalorder %s85, %s86
      %p97 = scmp.eq.s32.totalorder %s26, 0
      %p98 = por %p96, %p97
      %p99 = scmp.ne.s32.totalorder %s85, %s86
      %p100 = scmp.eq.s32.totalorder %s27, 1
      %p101 = por %p99, %p100
      %p103 = scmp.ne.s32.totalorder %s86, %s102
      %p104 = scmp.eq.s32.totalorder %s27, 0
      %p105 = por %p103, %p104
      %s106 = ssub.s32 %s21, %s28
      %p107 = scmp.eq.s32.totalorder %s106, 0
      %s109 = sadd.s32 %s108, 1
      %s110 = scalar_select %p107, %s108, %s109
      %p113 = pneg %p107
      %p114 = scmp.eq.s32.totalorder %s21, 1
      %p115 = por %p113, %p114
      %p116 = scmp.ne.s32.totalorder %s108, %s111
      %p117 = scmp.eq.s32.totalorder %s21, 0
      %p118 = por %p116, %p117
      %p119 = scmp.ne.s32.totalorder %s108, %s111
      %p120 = scmp.eq.s32.totalorder %s26, 1
      %p121 = por %p119, %p120
      %p122 = scmp.ne.s32.totalorder %s111, %s112
      %p123 = scmp.eq.s32.totalorder %s26, 0
      %p124 = por %p122, %p123
      %p125 = scmp.ne.s32.totalorder %s111, %s112
      %p126 = scmp.eq.s32.totalorder %s27, 1
      %p127 = por %p125, %p126
      %p129 = scmp.ne.s32.totalorder %s112, %s128
      %p130 = scmp.eq.s32.totalorder %s27, 0
      %p131 = por %p129, %p130
      %s132 = ssub.s32 %s21, %s28
      %p133 = scmp.eq.s32.totalorder %s132, 0
      %s135 = sadd.s32 %s134, 1
      %s136 = scalar_select %p133, %s134, %s135
      %p139 = pneg %p133
      %p140 = scmp.eq.s32.totalorder %s21, 1
      %p141 = por %p139, %p140
      %p142 = scmp.ne.s32.totalorder %s134, %s137
      %p143 = scmp.eq.s32.totalorder %s21, 0
      %p144 = por %p142, %p143
      %p145 = scmp.ne.s32.totalorder %s134, %s137
      %p146 = scmp.eq.s32.totalorder %s26, 1
      %p147 = por %p145, %p146
      %p148 = scmp.ne.s32.totalorder %s137, %s138
      %p149 = scmp.eq.s32.totalorder %s26, 0
      %p150 = por %p148, %p149
      %p151 = scmp.ne.s32.totalorder %s137, %s138
      %p152 = scmp.eq.s32.totalorder %s27, 1
      %p153 = por %p151, %p152
      %p155 = scmp.ne.s32.totalorder %s138, %s154
      %p156 = scmp.eq.s32.totalorder %s27, 0
      %p157 = por %p155, %p156
      %p158 = scmp.le.s32.totalorder 1, %s21
      %p159 = scmp.lt.s32.totalorder %s21, 3
      %p160 = pnand %p158, %p159
      %p161 = pneg %p160
      // Predicated region
      $region9: #{data_preprocessing_forward.3} parent=5 // pred_check
        _
      $region10: #{data_preprocessing_forward.3} parent=5 // pred_check_branch
        %163 = sbr.rel (%p160) target = $region12
      $region11: #{data_preprocessing_forward.3} parent=5 // pred_region
        %s164 = ssub.s32 %s21, 1
        // Predicated region
        $region13: #{data_preprocessing_forward.3} parent=11 // pred_check
          %p165 = pneg %p42
        $region14: #{data_preprocessing_forward.3} parent=11 // pred_check_branch
          %167 = sbr.rel (%p165) target = $region16
        $region15: #{data_preprocessing_forward.3} parent=11 // pred_region
          %s169 = ssub.s32 16, 16
          %170 = vsyncadd [#allocation5], %s169
          %s172 = sshll.u32 %s0, 4
          %s173 = int_to_ptr.vmem [resolvable:$true] %s172
          %175 = dma.vmem_to_smem %s173, 16, [#allocation2], [#allocation5]
        $region16: #{data_preprocessing_forward.3} parent=11 // pred_fallthru
          _
      $region12: #{data_preprocessing_forward.3} parent=5 // pred_fallthru
        _
      %p176 = scmp.lt.s32.totalorder %s21, 2
      // Predicated region
      $region17: #{data_preprocessing_forward.3} parent=5 // pred_check
        %p177 = pneg %p176
      $region18: #{data_preprocessing_forward.3} parent=5 // pred_check_branch
        %179 = sbr.rel (%p177) target = $region20
      $region19: #{data_preprocessing_forward.3} parent=5 // pred_region
        // Predicated region
        $region21: #{data_preprocessing_forward.3} parent=19 // pred_check
          %p180 = pneg %p64
        $region22: #{data_preprocessing_forward.3} parent=19 // pred_check_branch
          %182 = sbr.rel (%p180) target = $region24
        $region23: #{data_preprocessing_forward.3} parent=19 // pred_region
          %s183 = sadd.s32 %s21, 1
          %s184 = smul.u32 8, %s183
          %p185 = scmp.lt.s32.totalorder %s184, 31
          %s186 = scalar_select %p185, %s184, 31
          %s187 = smul.addr %s186, 4
          %s188 = smul.addr %s187, 8
          %s189 = scalar_lea.vmem %s1, %s188
          %s190 = sadd.s32 %s21, 1
          %s191 = smul.u32 8, %s190
        $region24: #{data_preprocessing_forward.3} parent=19 // pred_fallthru
          _
        // Predicated region
        $region25: #{data_preprocessing_forward.3} parent=19 // pred_check
          %p192 = pneg %p92
        $region26: #{data_preprocessing_forward.3} parent=19 // pred_check_branch
          %194 = sbr.rel (%p192) target = $region28
        $region27: #{data_preprocessing_forward.3} parent=19 // pred_region
          %s195 = sand.u32 %s82, 1
          %s196 = scalar_lea.sflag [#allocation3], %s195
          %s197 = sand.u32 %s82, 1
          %s198 = smul.addr %s197, 64
          %s199 = scalar_lea.vmem [#allocation6], %s198
          %s200 = sadd.s32 %s21, 1
          %s201 = smul.u32 8, %s200
          %s203 = ssub.s32 1024, 1024
          %204 = vsyncadd %s196, %s203
          %s205 = smul.addr %s201, 128
          %s206 = scalar_lea.hbm %s2, %s205
          %s207 = sshll.u32 %s199, 4
          %s208 = int_to_ptr.vmem [resolvable:$true] %s207
          %213 = dma.hbm_to_vmem [thread:$0]  %s206, 1024, %s208, %s196, 128, 128, 8
        $region28: #{data_preprocessing_forward.3} parent=19 // pred_fallthru
          _
      $region20: #{data_preprocessing_forward.3} parent=5 // pred_fallthru
        _
      %p214 = scmp.le.s32.totalorder 1, %s21
      %p215 = scmp.lt.s32.totalorder %s21, 3
      %p216 = pnand %p214, %p215
      %p217 = pneg %p216
      // Predicated region
      $region29: #{data_preprocessing_forward.3} parent=5 // pred_check
        _
      $region30: #{data_preprocessing_forward.3} parent=5 // pred_check_branch
        %219 = sbr.rel (%p216) target = $region32
      $region31: #{data_preprocessing_forward.3} parent=5 // pred_region
        %s220 = ssub.s32 %s21, 1
        // Predicated region
        $region33: #{data_preprocessing_forward.3} parent=31 // pred_check
          %p221 = pneg %p42
        $region34: #{data_preprocessing_forward.3} parent=31 // pred_check_branch
          %223 = sbr.rel (%p221) target = $region36
        $region35: #{data_preprocessing_forward.3} parent=31 // pred_region
          %224 = dma.done [#allocation5], 16
        $region36: #{data_preprocessing_forward.3} parent=31 // pred_fallthru
          _
        %s225 = sand.u32 %s85, 1
        %s226 = scalar_lea.sflag [#allocation3], %s225
        %s227 = sand.u32 %s85, 1
        %s228 = smul.addr %s227, 64
        %s229 = scalar_lea.vmem [#allocation6], %s228
        // Predicated region
        $region37: #{data_preprocessing_forward.3} parent=31 // pred_check
          %p230 = pneg %p98
        $region38: #{data_preprocessing_forward.3} parent=31 // pred_check_branch
          %232 = sbr.rel (%p230) target = $region40
        $region39: #{data_preprocessing_forward.3} parent=31 // pred_region
          %233 = dma.done %s226, 1024
        $region40: #{data_preprocessing_forward.3} parent=31 // pred_fallthru
          _
        %234 = sfence
        %p235 = pneg %p42
        %p236 = pneg %p39
        %s237 = sadd.s32 %s26, 1
        %s238 = smul.u32 8, %s237
        %p239 = scmp.lt.s32.totalorder %s238, 31
        %s240 = scalar_select %p239, %s238, 31
        %s241 = smul.addr %s240, 4
        %s242 = smul.addr %s241, 8
        %s243 = scalar_lea.vmem %s1, %s242
        %p244 = pneg %p70
        %p245 = pneg %p67
        %s246 = sand.u32 %s85, 1
        %s247 = scalar_lea.sflag [#allocation3], %s246
        %s248 = sand.u32 %s85, 1
        %s249 = smul.addr %s248, 64
        %s250 = scalar_lea.vmem [#allocation6], %s249
        %p251 = pneg %p98
        %p252 = pneg %p95
        %p253 = pneg %p124
        %p254 = pneg %p121
        %s255 = sand.u32 %s111, 1
        %s256 = scalar_lea.sflag [#allocation4], %s255
        %s257 = sand.u32 %s111, 1
        %s258 = smul.addr %s257, 256
        %s259 = scalar_lea.vmem [#allocation7], %s258
        %p260 = pneg %p150
        %p261 = pneg %p147
        %s262 = sand.u32 %s137, 1
        %s263 = scalar_lea.sflag [#allocation9], %s262
        %s264 = sand.u32 %s137, 1
        %s265 = smul.addr %s264, 64
        %s266 = scalar_lea.vmem [#allocation8], %s265
        %s267 = sadd.s32 %s26, 1
        %s268 = smul.u32 8, %s267
        %p269 = scmp.lt.s32.totalorder %s268, 31
        %s270 = scalar_select %p269, %s268, 31
        %s271 = smul.addr %s270, 4
        %s272 = smul.addr %s271, 8
        %s273 = scalar_lea.vmem %s1, %s272
        %s274 = sadd.s32 %s26, 1
        %s275 = smul.u32 8, %s274
        %s276 = sadd.s32 %s26, 1
        %s277 = smul.u32 8, %s276
        %s278 = smul.u32 4, %s26
        %s279 = smul.u32 4, %s26
        %s282 = sld [smem:[#allocation2]]
        %s283 = sld [smem:[#allocation2 + $0x1]]
        %s284 = ssub.f32 %s283, %s282
        %p285 = scmp.eq.f32.partialorder %s284, 0.0
        %s286 = scalar_select %p285, 1.0, %s284
        %v287 = vld [vmem:[%s273 + $0x8] sm:$0xff]
        %v288 = vld [vmem:[%s273 + $0x28] sm:$0xff]
        %v289 = vld [vmem:[%s273 + $0x48] sm:$0xff]
        %v290 = vld [vmem:[%s273 + $0x68] sm:$0xff]
        %v291 = vld [vmem:[%s273 + $0x88] sm:$0xff]
        %v292 = vld [vmem:[%s273 + $0xa8] sm:$0xff]
        %v293 = vld [vmem:[%s273 + $0xc8] sm:$0xff]
        %v294 = vld [vmem:[%s273 + $0xe8] sm:$0xff]
        %vm295 = vcmask 130112
        %v296 = vsel %vm295, %v287, -inf
        %v297 = vsel %vm295, %v288, -inf
        %v298 = vsel %vm295, %v289, -inf
        %v299 = vsel %vm295, %v290, -inf
        %v300 = vsel %vm295, %v291, -inf
        %v301 = vmax.f32 %v296, %v300
        %v302 = vsel %vm295, %v292, -inf
        %v303 = vmax.f32 %v297, %v302
        %v304 = vsel %vm295, %v293, -inf
        %v305 = vmax.f32 %v298, %v304
        %v306 = vsel %vm295, %v294, -inf
        %v307 = vmax.f32 %v299, %v306
        %v308 = vmax.f32 %v301, %v303
        %v309 = vmax.f32 %v305, %v307
        %v310 = vmax.f32 %v308, %v309
        %v311 = vsel %vm295, %v310, -inf
        %312 = vmax.xlane.f32.xlu0 %v311
        %v313 = vpop.xlane.xlu0 %312
        %v314 = vrot.slane %v313, 4
        %v315 = vmax.f32 %v313, %v314
        %v316 = vrot.slane %v315, 2
        %v317 = vmax.f32 %v315, %v316
        %v318 = vrot.slane %v317, 1
        %v319 = vmax.f32 %v317, %v318
        %s320 = vtos %v319
        %p321 = scmp.eq.f32.partialorder %s320, %s282
        %s322 = ssub.f32 %s320, %s282
        %s323 = scalar_select %p321, %s286, %s322
        %v324 = vstv %s323
        %v325 = vrcp.pop %v324
        %s326 = vtos %v325
        %v327 = vstv %s282
        %v328 = vsub.f32 %v287, %v327
        %v329 = vsub.f32 %v288, %v327
        %v330 = vsub.f32 %v289, %v327
        %v331 = vsub.f32 %v290, %v327
        %v332 = vsub.f32 %v291, %v327
        %v333 = vsub.f32 %v292, %v327
        %v334 = vsub.f32 %v293, %v327
        %v335 = vsub.f32 %v294, %v327
        %v336 = vstv %s326
        %v337 = vmul.f32 %v328, %v336
        %v338 = vmul.f32 %v329, %v336
        %v339 = vmul.f32 %v330, %v336
        %v340 = vmul.f32 %v331, %v336
        %v341 = vmul.f32 %v332, %v336
        %v342 = vmul.f32 %v333, %v336
        %v343 = vmul.f32 %v334, %v336
        %v344 = vmul.f32 %v335, %v336
        %353 = vrot.lane.b32.xlu0 %v337, 120
        %v354 = vpop.permute.xlu0 %353
        %355 = vrot.lane.b32.xlu0 %v338, 120
        %v356 = vpop.permute.xlu0 %355
        %357 = vrot.lane.b32.xlu0 %v339, 120
        %v358 = vpop.permute.xlu0 %357
        %359 = vrot.lane.b32.xlu0 %v340, 120
        %v360 = vpop.permute.xlu0 %359
        %361 = vrot.lane.b32.xlu0 %v341, 120
        %v362 = vpop.permute.xlu0 %361
        %363 = vrot.lane.b32.xlu0 %v342, 120
        %v364 = vpop.permute.xlu0 %363
        %365 = vrot.lane.b32.xlu0 %v343, 120
        %v366 = vpop.permute.xlu0 %365
        %367 = vrot.lane.b32.xlu0 %v344, 120
        %v368 = vpop.permute.xlu0 %367
        %vm377 = vcmask 64512
        %378 = vst.msk [vmem:[%s259] sm:$0xff] %vm377, %v354
        %379 = vst.msk [vmem:[%s259 + $0x8] sm:$0xff] %vm377, %v356
        %380 = vst.msk [vmem:[%s259 + $0x10] sm:$0xff] %vm377, %v358
        %381 = vst.msk [vmem:[%s259 + $0x18] sm:$0xff] %vm377, %v360
        %382 = vst.msk [vmem:[%s259 + $0x20] sm:$0xff] %vm377, %v362
        %383 = vst.msk [vmem:[%s259 + $0x28] sm:$0xff] %vm377, %v364
        %384 = vst.msk [vmem:[%s259 + $0x30] sm:$0xff] %vm377, %v366
        %385 = vst.msk [vmem:[%s259 + $0x38] sm:$0xff] %vm377, %v368
        %v386 = vld [vmem:[%s229] sm:$0xc]
        %v387 = vld [vmem:[%s229 + $0x8] sm:$0xc]
        %v388 = vld [vmem:[%s229 + $0x10] sm:$0xc]
        %v389 = vld [vmem:[%s229 + $0x18] sm:$0xc]
        %v390 = vld [vmem:[%s229 + $0x20] sm:$0xc]
        %v391 = vld [vmem:[%s229 + $0x28] sm:$0xc]
        %v392 = vld [vmem:[%s229 + $0x30] sm:$0xc]
        %v393 = vld [vmem:[%s229 + $0x38] sm:$0xc]
        %vm394 = vnez %v386
        %vm395 = vnez %v387
        %vm396 = vnez %v388
        %vm397 = vnez %v389
        %vm398 = vnez %v390
        %vm399 = vnez %v391
        %vm400 = vnez %v392
        %vm401 = vnez %v393
        %v402 = vsel %vm394, 16843009, 0
        %v403 = vsel %vm395, 16843009, 0
        %v404 = vsel %vm396, 16843009, 0
        %v405 = vsel %vm397, 16843009, 0
        %v406 = vsel %vm398, 16843009, 0
        %v407 = vsel %vm399, 16843009, 0
        %v408 = vsel %vm400, 16843009, 0
        %v409 = vsel %vm401, 16843009, 0
        %v410 = vunpack.c.1.s8 %v402
        %v411 = vunpack.c.1.s8 %v403
        %v412 = vunpack.c.1.s8 %v404
        %v413 = vunpack.c.1.s8 %v405
        %v414 = vunpack.c.1.s8 %v406
        %v415 = vunpack.c.1.s8 %v407
        %v416 = vunpack.c.1.s8 %v408
        %v417 = vunpack.c.1.s8 %v409
        %v418 = vpack.c.b16 %v410, %v410
        %v419 = vpack.c.b8 %v418, %v418
        %v420 = vpack.c.b16 %v411, %v411
        %v421 = vpack.c.b8 %v420, %v420
        %v422 = vpack.c.b16 %v412, %v412
        %v423 = vpack.c.b8 %v422, %v422
        %v424 = vpack.c.b16 %v413, %v413
        %v425 = vpack.c.b8 %v424, %v424
        %v426 = vpack.c.b16 %v414, %v414
        %v427 = vpack.c.b8 %v426, %v426
        %v428 = vpack.c.b16 %v415, %v415
        %v429 = vpack.c.b8 %v428, %v428
        %v430 = vpack.c.b16 %v416, %v416
        %v431 = vpack.c.b8 %v430, %v430
        %v432 = vpack.c.b16 %v417, %v417
        %v433 = vpack.c.b8 %v432, %v432
        %434 = vrot.lane.b32.xlu0 %v419, 120
        %v435 = vpop.permute.xlu0 %434
        %436 = vrot.lane.b32.xlu0 %v421, 120
        %v437 = vpop.permute.xlu0 %436
        %438 = vrot.lane.b32.xlu0 %v423, 120
        %v439 = vpop.permute.xlu0 %438
        %440 = vrot.lane.b32.xlu0 %v425, 120
        %v441 = vpop.permute.xlu0 %440
        %442 = vrot.lane.b32.xlu0 %v427, 120
        %v443 = vpop.permute.xlu0 %442
        %444 = vrot.lane.b32.xlu0 %v429, 120
        %v445 = vpop.permute.xlu0 %444
        %446 = vrot.lane.b32.xlu0 %v431, 120
        %v447 = vpop.permute.xlu0 %446
        %448 = vrot.lane.b32.xlu0 %v433, 120
        %v449 = vpop.permute.xlu0 %448
        %vm450 = vcmask 58368
        %451 = vst.msk [vmem:[%s266] sm:$0x3] %vm450, %v435
        %452 = vst.msk [vmem:[%s266 + $0x2] sm:$0x3] %vm450, %v437
        %453 = vst.msk [vmem:[%s266 + $0x4] sm:$0x3] %vm450, %v439
        %454 = vst.msk [vmem:[%s266 + $0x6] sm:$0x3] %vm450, %v441
        %455 = vst.msk [vmem:[%s266 + $0x8] sm:$0x3] %vm450, %v443
        %456 = vst.msk [vmem:[%s266 + $0xa] sm:$0x3] %vm450, %v445
        %457 = vst.msk [vmem:[%s266 + $0xc] sm:$0x3] %vm450, %v447
        %458 = vst.msk [vmem:[%s266 + $0xe] sm:$0x3] %vm450, %v449
        %v459 = vld [vmem:[%s273 + $0x8] sm:$0xff]
        %v460 = vld [vmem:[%s273 + $0x28] sm:$0xff]
        %v461 = vld [vmem:[%s273 + $0x48] sm:$0xff]
        %v462 = vld [vmem:[%s273 + $0x68] sm:$0xff]
        %v463 = vld [vmem:[%s273 + $0x88] sm:$0xff]
        %v464 = vld [vmem:[%s273 + $0xa8] sm:$0xff]
        %v465 = vld [vmem:[%s273 + $0xc8] sm:$0xff]
        %v466 = vld [vmem:[%s273 + $0xe8] sm:$0xff]
        %vm467 = vcmask 195712
        %v468 = vsel %vm467, %v459, -inf
        %v469 = vsel %vm467, %v460, -inf
        %v470 = vsel %vm467, %v461, -inf
        %v471 = vsel %vm467, %v462, -inf
        %v472 = vsel %vm467, %v463, -inf
        %v473 = vmax.f32 %v468, %v472
        %v474 = vsel %vm467, %v464, -inf
        %v475 = vmax.f32 %v469, %v474
        %v476 = vsel %vm467, %v465, -inf
        %v477 = vmax.f32 %v470, %v476
        %v478 = vsel %vm467, %v466, -inf
        %v479 = vmax.f32 %v471, %v478
        %v480 = vmax.f32 %v473, %v475
        %v481 = vmax.f32 %v477, %v479
        %v482 = vmax.f32 %v480, %v481
        %v483 = vsel %vm467, %v482, -inf
        %484 = vmax.xlane.f32.xlu0 %v483
        %v485 = vpop.xlane.xlu0 %484
        %v486 = vrot.slane %v485, 4
        %v487 = vmax.f32 %v485, %v486
        %v488 = vrot.slane %v487, 2
        %v489 = vmax.f32 %v487, %v488
        %v490 = vrot.slane %v489, 1
        %v491 = vmax.f32 %v489, %v490
        %s492 = vtos %v491
        %p493 = scmp.eq.f32.partialorder %s492, %s282
        %s494 = ssub.f32 %s492, %s282
        %s495 = scalar_select %p493, %s286, %s494
        %v496 = vstv %s495
        %v497 = vrcp.pop %v496
        %s498 = vtos %v497
        %v499 = vsub.f32 %v459, %v327
        %v500 = vsub.f32 %v460, %v327
        %v501 = vsub.f32 %v461, %v327
        %v502 = vsub.f32 %v462, %v327
        %v503 = vsub.f32 %v463, %v327
        %v504 = vsub.f32 %v464, %v327
        %v505 = vsub.f32 %v465, %v327
        %v506 = vsub.f32 %v466, %v327
        %v507 = vstv %s498
        %v508 = vmul.f32 %v499, %v507
        %v509 = vmul.f32 %v500, %v507
        %v510 = vmul.f32 %v501, %v507
        %v511 = vmul.f32 %v502, %v507
        %v512 = vmul.f32 %v503, %v507
        %v513 = vmul.f32 %v504, %v507
        %v514 = vmul.f32 %v505, %v507
        %v515 = vmul.f32 %v506, %v507
        %524 = vrot.lane.b32.xlu0 %v508, 112
        %v525 = vpop.permute.xlu0 %524
        %526 = vrot.lane.b32.xlu0 %v509, 112
        %v527 = vpop.permute.xlu0 %526
        %528 = vrot.lane.b32.xlu0 %v510, 112
        %v529 = vpop.permute.xlu0 %528
        %530 = vrot.lane.b32.xlu0 %v511, 112
        %v531 = vpop.permute.xlu0 %530
        %532 = vrot.lane.b32.xlu0 %v512, 112
        %v533 = vpop.permute.xlu0 %532
        %534 = vrot.lane.b32.xlu0 %v513, 112
        %v535 = vpop.permute.xlu0 %534
        %536 = vrot.lane.b32.xlu0 %v514, 112
        %v537 = vpop.permute.xlu0 %536
        %538 = vrot.lane.b32.xlu0 %v515, 112
        %v539 = vpop.permute.xlu0 %538
        %s548 = scalar_lea.vmem %s259, 64 [#allocation7]
        %549 = vst.msk [vmem:[%s548] sm:$0xff] %vm377, %v525
        %550 = vst.msk [vmem:[%s548 + $0x8] sm:$0xff] %vm377, %v527
        %551 = vst.msk [vmem:[%s548 + $0x10] sm:$0xff] %vm377, %v529
        %552 = vst.msk [vmem:[%s548 + $0x18] sm:$0xff] %vm377, %v531
        %553 = vst.msk [vmem:[%s548 + $0x20] sm:$0xff] %vm377, %v533
        %554 = vst.msk [vmem:[%s548 + $0x28] sm:$0xff] %vm377, %v535
        %555 = vst.msk [vmem:[%s548 + $0x30] sm:$0xff] %vm377, %v537
        %556 = vst.msk [vmem:[%s548 + $0x38] sm:$0xff] %vm377, %v539
        %v557 = vld [vmem:[%s229] sm:$0xc]
        %v558 = vld [vmem:[%s229 + $0x8] sm:$0xc]
        %v559 = vld [vmem:[%s229 + $0x10] sm:$0xc]
        %v560 = vld [vmem:[%s229 + $0x18] sm:$0xc]
        %v561 = vld [vmem:[%s229 + $0x20] sm:$0xc]
        %v562 = vld [vmem:[%s229 + $0x28] sm:$0xc]
        %v563 = vld [vmem:[%s229 + $0x30] sm:$0xc]
        %v564 = vld [vmem:[%s229 + $0x38] sm:$0xc]
        %vm565 = vnez %v557
        %vm566 = vnez %v558
        %vm567 = vnez %v559
        %vm568 = vnez %v560
        %vm569 = vnez %v561
        %vm570 = vnez %v562
        %vm571 = vnez %v563
        %vm572 = vnez %v564
        %v573 = vsel %vm565, 16843009, 0
        %v574 = vsel %vm566, 16843009, 0
        %v575 = vsel %vm567, 16843009, 0
        %v576 = vsel %vm568, 16843009, 0
        %v577 = vsel %vm569, 16843009, 0
        %v578 = vsel %vm570, 16843009, 0
        %v579 = vsel %vm571, 16843009, 0
        %v580 = vsel %vm572, 16843009, 0
        %v581 = vunpack.c.1.s8 %v573
        %v582 = vunpack.c.1.s8 %v574
        %v583 = vunpack.c.1.s8 %v575
        %v584 = vunpack.c.1.s8 %v576
        %v585 = vunpack.c.1.s8 %v577
        %v586 = vunpack.c.1.s8 %v578
        %v587 = vunpack.c.1.s8 %v579
        %v588 = vunpack.c.1.s8 %v580
        %v589 = vpack.c.b16 %v581, %v581
        %v590 = vpack.c.b8 %v589, %v589
        %v591 = vpack.c.b16 %v582, %v582
        %v592 = vpack.c.b8 %v591, %v591
        %v593 = vpack.c.b16 %v583, %v583
        %v594 = vpack.c.b8 %v593, %v593
        %v595 = vpack.c.b16 %v584, %v584
        %v596 = vpack.c.b8 %v595, %v595
        %v597 = vpack.c.b16 %v585, %v585
        %v598 = vpack.c.b8 %v597, %v597
        %v599 = vpack.c.b16 %v586, %v586
        %v600 = vpack.c.b8 %v599, %v599
        %v601 = vpack.c.b16 %v587, %v587
        %v602 = vpack.c.b8 %v601, %v601
        %v603 = vpack.c.b16 %v588, %v588
        %v604 = vpack.c.b8 %v603, %v603
        %605 = vrot.lane.b32.xlu0 %v590, 112
        %v606 = vpop.permute.xlu0 %605
        %607 = vrot.lane.b32.xlu0 %v592, 112
        %v608 = vpop.permute.xlu0 %607
        %609 = vrot.lane.b32.xlu0 %v594, 112
        %v610 = vpop.permute.xlu0 %609
        %611 = vrot.lane.b32.xlu0 %v596, 112
        %v612 = vpop.permute.xlu0 %611
        %613 = vrot.lane.b32.xlu0 %v598, 112
        %v614 = vpop.permute.xlu0 %613
        %615 = vrot.lane.b32.xlu0 %v600, 112
        %v616 = vpop.permute.xlu0 %615
        %617 = vrot.lane.b32.xlu0 %v602, 112
        %v618 = vpop.permute.xlu0 %617
        %619 = vrot.lane.b32.xlu0 %v604, 112
        %v620 = vpop.permute.xlu0 %619
        %s621 = scalar_lea.vmem %s266, 16 [#allocation8]
        %622 = vst.msk [vmem:[%s621] sm:$0x3] %vm450, %v606
        %623 = vst.msk [vmem:[%s621 + $0x2] sm:$0x3] %vm450, %v608
        %624 = vst.msk [vmem:[%s621 + $0x4] sm:$0x3] %vm450, %v610
        %625 = vst.msk [vmem:[%s621 + $0x6] sm:$0x3] %vm450, %v612
        %626 = vst.msk [vmem:[%s621 + $0x8] sm:$0x3] %vm450, %v614
        %627 = vst.msk [vmem:[%s621 + $0xa] sm:$0x3] %vm450, %v616
        %628 = vst.msk [vmem:[%s621 + $0xc] sm:$0x3] %vm450, %v618
        %629 = vst.msk [vmem:[%s621 + $0xe] sm:$0x3] %vm450, %v620
        %v630 = vld [vmem:[%s273 + $0x10] sm:$0xff]
        %v631 = vld [vmem:[%s273 + $0x30] sm:$0xff]
        %v632 = vld [vmem:[%s273 + $0x50] sm:$0xff]
        %v633 = vld [vmem:[%s273 + $0x70] sm:$0xff]
        %v634 = vld [vmem:[%s273 + $0x90] sm:$0xff]
        %v635 = vld [vmem:[%s273 + $0xb0] sm:$0xff]
        %v636 = vld [vmem:[%s273 + $0xd0] sm:$0xff]
        %v637 = vld [vmem:[%s273 + $0xf0] sm:$0xff]
        %v638 = vsel %vm295, %v630, -inf
        %v639 = vsel %vm295, %v631, -inf
        %v640 = vsel %vm295, %v632, -inf
        %v641 = vsel %vm295, %v633, -inf
        %v642 = vsel %vm295, %v634, -inf
        %v643 = vmax.f32 %v638, %v642
        %v644 = vsel %vm295, %v635, -inf
        %v645 = vmax.f32 %v639, %v644
        %v646 = vsel %vm295, %v636, -inf
        %v647 = vmax.f32 %v640, %v646
        %v648 = vsel %vm295, %v637, -inf
        %v649 = vmax.f32 %v641, %v648
        %v650 = vmax.f32 %v643, %v645
        %v651 = vmax.f32 %v647, %v649
        %v652 = vmax.f32 %v650, %v651
        %v653 = vsel %vm295, %v652, -inf
        %654 = vmax.xlane.f32.xlu0 %v653
        %v655 = vpop.xlane.xlu0 %654
        %v656 = vrot.slane %v655, 4
        %v657 = vmax.f32 %v655, %v656
        %v658 = vrot.slane %v657, 2
        %v659 = vmax.f32 %v657, %v658
        %v660 = vrot.slane %v659, 1
        %v661 = vmax.f32 %v659, %v660
        %s662 = vtos %v661
        %p663 = scmp.eq.f32.partialorder %s662, %s282
        %s664 = ssub.f32 %s662, %s282
        %s665 = scalar_select %p663, %s286, %s664
        %v666 = vstv %s665
        %v667 = vrcp.pop %v666
        %s668 = vtos %v667
        %v669 = vsub.f32 %v630, %v327
        %v670 = vsub.f32 %v631, %v327
        %v671 = vsub.f32 %v632, %v327
        %v672 = vsub.f32 %v633, %v327
        %v673 = vsub.f32 %v634, %v327
        %v674 = vsub.f32 %v635, %v327
        %v675 = vsub.f32 %v636, %v327
        %v676 = vsub.f32 %v637, %v327
        %v677 = vstv %s668
        %v678 = vmul.f32 %v669, %v677
        %v679 = vmul.f32 %v670, %v677
        %v680 = vmul.f32 %v671, %v677
        %v681 = vmul.f32 %v672, %v677
        %v682 = vmul.f32 %v673, %v677
        %v683 = vmul.f32 %v674, %v677
        %v684 = vmul.f32 %v675, %v677
        %v685 = vmul.f32 %v676, %v677
        %694 = vrot.lane.b32.xlu0 %v678, 120
        %v695 = vpop.permute.xlu0 %694
        %696 = vrot.lane.b32.xlu0 %v679, 120
        %v697 = vpop.permute.xlu0 %696
        %698 = vrot.lane.b32.xlu0 %v680, 120
        %v699 = vpop.permute.xlu0 %698
        %700 = vrot.lane.b32.xlu0 %v681, 120
        %v701 = vpop.permute.xlu0 %700
        %702 = vrot.lane.b32.xlu0 %v682, 120
        %v703 = vpop.permute.xlu0 %702
        %704 = vrot.lane.b32.xlu0 %v683, 120
        %v705 = vpop.permute.xlu0 %704
        %706 = vrot.lane.b32.xlu0 %v684, 120
        %v707 = vpop.permute.xlu0 %706
        %708 = vrot.lane.b32.xlu0 %v685, 120
        %v709 = vpop.permute.xlu0 %708
        %s718 = scalar_lea.vmem %s259, 128 [#allocation7]
        %719 = vst.msk [vmem:[%s718] sm:$0xff] %vm377, %v695
        %720 = vst.msk [vmem:[%s718 + $0x8] sm:$0xff] %vm377, %v697
        %721 = vst.msk [vmem:[%s718 + $0x10] sm:$0xff] %vm377, %v699
        %722 = vst.msk [vmem:[%s718 + $0x18] sm:$0xff] %vm377, %v701
        %723 = vst.msk [vmem:[%s718 + $0x20] sm:$0xff] %vm377, %v703
        %724 = vst.msk [vmem:[%s718 + $0x28] sm:$0xff] %vm377, %v705
        %725 = vst.msk [vmem:[%s718 + $0x30] sm:$0xff] %vm377, %v707
        %726 = vst.msk [vmem:[%s718 + $0x38] sm:$0xff] %vm377, %v709
        %v727 = vld [vmem:[%s229] sm:$0x30]
        %v728 = vld [vmem:[%s229 + $0x8] sm:$0x30]
        %v729 = vld [vmem:[%s229 + $0x10] sm:$0x30]
        %v730 = vld [vmem:[%s229 + $0x18] sm:$0x30]
        %v731 = vld [vmem:[%s229 + $0x20] sm:$0x30]
        %v732 = vld [vmem:[%s229 + $0x28] sm:$0x30]
        %v733 = vld [vmem:[%s229 + $0x30] sm:$0x30]
        %v734 = vld [vmem:[%s229 + $0x38] sm:$0x30]
        %vm735 = vnez %v727
        %vm736 = vnez %v728
        %vm737 = vnez %v729
        %vm738 = vnez %v730
        %vm739 = vnez %v731
        %vm740 = vnez %v732
        %vm741 = vnez %v733
        %vm742 = vnez %v734
        %v743 = vsel %vm735, 16843009, 0
        %v744 = vsel %vm736, 16843009, 0
        %v745 = vsel %vm737, 16843009, 0
        %v746 = vsel %vm738, 16843009, 0
        %v747 = vsel %vm739, 16843009, 0
        %v748 = vsel %vm740, 16843009, 0
        %v749 = vsel %vm741, 16843009, 0
        %v750 = vsel %vm742, 16843009, 0
        %v751 = vunpack.c.2.s8 %v743
        %v752 = vunpack.c.2.s8 %v744
        %v753 = vunpack.c.2.s8 %v745
        %v754 = vunpack.c.2.s8 %v746
        %v755 = vunpack.c.2.s8 %v747
        %v756 = vunpack.c.2.s8 %v748
        %v757 = vunpack.c.2.s8 %v749
        %v758 = vunpack.c.2.s8 %v750
        %v759 = vpack.c.b16 %v751, %v751
        %v760 = vpack.c.b8 %v759, %v759
        %v761 = vpack.c.b16 %v752, %v752
        %v762 = vpack.c.b8 %v761, %v761
        %v763 = vpack.c.b16 %v753, %v753
        %v764 = vpack.c.b8 %v763, %v763
        %v765 = vpack.c.b16 %v754, %v754
        %v766 = vpack.c.b8 %v765, %v765
        %v767 = vpack.c.b16 %v755, %v755
        %v768 = vpack.c.b8 %v767, %v767
        %v769 = vpack.c.b16 %v756, %v756
        %v770 = vpack.c.b8 %v769, %v769
        %v771 = vpack.c.b16 %v757, %v757
        %v772 = vpack.c.b8 %v771, %v771
        %v773 = vpack.c.b16 %v758, %v758
        %v774 = vpack.c.b8 %v773, %v773
        %775 = vrot.lane.b32.xlu0 %v760, 120
        %v776 = vpop.permute.xlu0 %775
        %777 = vrot.lane.b32.xlu0 %v762, 120
        %v778 = vpop.permute.xlu0 %777
        %779 = vrot.lane.b32.xlu0 %v764, 120
        %v780 = vpop.permute.xlu0 %779
        %781 = vrot.lane.b32.xlu0 %v766, 120
        %v782 = vpop.permute.xlu0 %781
        %783 = vrot.lane.b32.xlu0 %v768, 120
        %v784 = vpop.permute.xlu0 %783
        %785 = vrot.lane.b32.xlu0 %v770, 120
        %v786 = vpop.permute.xlu0 %785
        %787 = vrot.lane.b32.xlu0 %v772, 120
        %v788 = vpop.permute.xlu0 %787
        %789 = vrot.lane.b32.xlu0 %v774, 120
        %v790 = vpop.permute.xlu0 %789
        %s791 = scalar_lea.vmem %s266, 32 [#allocation8]
        %792 = vst.msk [vmem:[%s791] sm:$0x3] %vm450, %v776
        %793 = vst.msk [vmem:[%s791 + $0x2] sm:$0x3] %vm450, %v778
        %794 = vst.msk [vmem:[%s791 + $0x4] sm:$0x3] %vm450, %v780
        %795 = vst.msk [vmem:[%s791 + $0x6] sm:$0x3] %vm450, %v782
        %796 = vst.msk [vmem:[%s791 + $0x8] sm:$0x3] %vm450, %v784
        %797 = vst.msk [vmem:[%s791 + $0xa] sm:$0x3] %vm450, %v786
        %798 = vst.msk [vmem:[%s791 + $0xc] sm:$0x3] %vm450, %v788
        %799 = vst.msk [vmem:[%s791 + $0xe] sm:$0x3] %vm450, %v790
        %v800 = vld [vmem:[%s273 + $0x10] sm:$0xff]
        %v801 = vld [vmem:[%s273 + $0x30] sm:$0xff]
        %v802 = vld [vmem:[%s273 + $0x50] sm:$0xff]
        %v803 = vld [vmem:[%s273 + $0x70] sm:$0xff]
        %v804 = vld [vmem:[%s273 + $0x90] sm:$0xff]
        %v805 = vld [vmem:[%s273 + $0xb0] sm:$0xff]
        %v806 = vld [vmem:[%s273 + $0xd0] sm:$0xff]
        %v807 = vld [vmem:[%s273 + $0xf0] sm:$0xff]
        %v808 = vsel %vm467, %v800, -inf
        %v809 = vsel %vm467, %v801, -inf
        %v810 = vsel %vm467, %v802, -inf
        %v811 = vsel %vm467, %v803, -inf
        %v812 = vsel %vm467, %v804, -inf
        %v813 = vmax.f32 %v808, %v812
        %v814 = vsel %vm467, %v805, -inf
        %v815 = vmax.f32 %v809, %v814
        %v816 = vsel %vm467, %v806, -inf
        %v817 = vmax.f32 %v810, %v816
        %v818 = vsel %vm467, %v807, -inf
        %v819 = vmax.f32 %v811, %v818
        %v820 = vmax.f32 %v813, %v815
        %v821 = vmax.f32 %v817, %v819
        %v822 = vmax.f32 %v820, %v821
        %v823 = vsel %vm467, %v822, -inf
        %824 = vmax.xlane.f32.xlu0 %v823
        %v825 = vpop.xlane.xlu0 %824
        %v826 = vrot.slane %v825, 4
        %v827 = vmax.f32 %v825, %v826
        %v828 = vrot.slane %v827, 2
        %v829 = vmax.f32 %v827, %v828
        %v830 = vrot.slane %v829, 1
        %v831 = vmax.f32 %v829, %v830
        %s832 = vtos %v831
        %p833 = scmp.eq.f32.partialorder %s832, %s282
        %s834 = ssub.f32 %s832, %s282
        %s835 = scalar_select %p833, %s286, %s834
        %v836 = vstv %s835
        %v837 = vrcp.pop %v836
        %s838 = vtos %v837
        %v839 = vsub.f32 %v800, %v327
        %v840 = vsub.f32 %v801, %v327
        %v841 = vsub.f32 %v802, %v327
        %v842 = vsub.f32 %v803, %v327
        %v843 = vsub.f32 %v804, %v327
        %v844 = vsub.f32 %v805, %v327
        %v845 = vsub.f32 %v806, %v327
        %v846 = vsub.f32 %v807, %v327
        %v847 = vstv %s838
        %v848 = vmul.f32 %v839, %v847
        %v849 = vmul.f32 %v840, %v847
        %v850 = vmul.f32 %v841, %v847
        %v851 = vmul.f32 %v842, %v847
        %v852 = vmul.f32 %v843, %v847
        %v853 = vmul.f32 %v844, %v847
        %v854 = vmul.f32 %v845, %v847
        %v855 = vmul.f32 %v846, %v847
        %864 = vrot.lane.b32.xlu0 %v848, 112
        %v865 = vpop.permute.xlu0 %864
        %866 = vrot.lane.b32.xlu0 %v849, 112
        %v867 = vpop.permute.xlu0 %866
        %868 = vrot.lane.b32.xlu0 %v850, 112
        %v869 = vpop.permute.xlu0 %868
        %870 = vrot.lane.b32.xlu0 %v851, 112
        %v871 = vpop.permute.xlu0 %870
        %872 = vrot.lane.b32.xlu0 %v852, 112
        %v873 = vpop.permute.xlu0 %872
        %874 = vrot.lane.b32.xlu0 %v853, 112
        %v875 = vpop.permute.xlu0 %874
        %876 = vrot.lane.b32.xlu0 %v854, 112
        %v877 = vpop.permute.xlu0 %876
        %878 = vrot.lane.b32.xlu0 %v855, 112
        %v879 = vpop.permute.xlu0 %878
        %s888 = scalar_lea.vmem %s259, 192 [#allocation7]
        %889 = vst.msk [vmem:[%s888] sm:$0xff] %vm377, %v865
        %890 = vst.msk [vmem:[%s888 + $0x8] sm:$0xff] %vm377, %v867
        %891 = vst.msk [vmem:[%s888 + $0x10] sm:$0xff] %vm377, %v869
        %892 = vst.msk [vmem:[%s888 + $0x18] sm:$0xff] %vm377, %v871
        %893 = vst.msk [vmem:[%s888 + $0x20] sm:$0xff] %vm377, %v873
        %894 = vst.msk [vmem:[%s888 + $0x28] sm:$0xff] %vm377, %v875
        %895 = vst.msk [vmem:[%s888 + $0x30] sm:$0xff] %vm377, %v877
        %896 = vst.msk [vmem:[%s888 + $0x38] sm:$0xff] %vm377, %v879
        %v897 = vld [vmem:[%s229] sm:$0x30]
        %v898 = vld [vmem:[%s229 + $0x8] sm:$0x30]
        %v899 = vld [vmem:[%s229 + $0x10] sm:$0x30]
        %v900 = vld [vmem:[%s229 + $0x18] sm:$0x30]
        %v901 = vld [vmem:[%s229 + $0x20] sm:$0x30]
        %v902 = vld [vmem:[%s229 + $0x28] sm:$0x30]
        %v903 = vld [vmem:[%s229 + $0x30] sm:$0x30]
        %v904 = vld [vmem:[%s229 + $0x38] sm:$0x30]
        %vm905 = vnez %v897
        %vm906 = vnez %v898
        %vm907 = vnez %v899
        %vm908 = vnez %v900
        %vm909 = vnez %v901
        %vm910 = vnez %v902
        %vm911 = vnez %v903
        %vm912 = vnez %v904
        %v913 = vsel %vm905, 16843009, 0
        %v914 = vsel %vm906, 16843009, 0
        %v915 = vsel %vm907, 16843009, 0
        %v916 = vsel %vm908, 16843009, 0
        %v917 = vsel %vm909, 16843009, 0
        %v918 = vsel %vm910, 16843009, 0
        %v919 = vsel %vm911, 16843009, 0
        %v920 = vsel %vm912, 16843009, 0
        %v921 = vunpack.c.2.s8 %v913
        %v922 = vunpack.c.2.s8 %v914
        %v923 = vunpack.c.2.s8 %v915
        %v924 = vunpack.c.2.s8 %v916
        %v925 = vunpack.c.2.s8 %v917
        %v926 = vunpack.c.2.s8 %v918
        %v927 = vunpack.c.2.s8 %v919
        %v928 = vunpack.c.2.s8 %v920
        %v929 = vpack.c.b16 %v921, %v921
        %v930 = vpack.c.b8 %v929, %v929
        %v931 = vpack.c.b16 %v922, %v922
        %v932 = vpack.c.b8 %v931, %v931
        %v933 = vpack.c.b16 %v923, %v923
        %v934 = vpack.c.b8 %v933, %v933
        %v935 = vpack.c.b16 %v924, %v924
        %v936 = vpack.c.b8 %v935, %v935
        %v937 = vpack.c.b16 %v925, %v925
        %v938 = vpack.c.b8 %v937, %v937
        %v939 = vpack.c.b16 %v926, %v926
        %v940 = vpack.c.b8 %v939, %v939
        %v941 = vpack.c.b16 %v927, %v927
        %v942 = vpack.c.b8 %v941, %v941
        %v943 = vpack.c.b16 %v928, %v928
        %v944 = vpack.c.b8 %v943, %v943
        %945 = vrot.lane.b32.xlu0 %v930, 112
        %v946 = vpop.permute.xlu0 %945
        %947 = vrot.lane.b32.xlu0 %v932, 112
        %v948 = vpop.permute.xlu0 %947
        %949 = vrot.lane.b32.xlu0 %v934, 112
        %v950 = vpop.permute.xlu0 %949
        %951 = vrot.lane.b32.xlu0 %v936, 112
        %v952 = vpop.permute.xlu0 %951
        %953 = vrot.lane.b32.xlu0 %v938, 112
        %v954 = vpop.permute.xlu0 %953
        %955 = vrot.lane.b32.xlu0 %v940, 112
        %v956 = vpop.permute.xlu0 %955
        %957 = vrot.lane.b32.xlu0 %v942, 112
        %v958 = vpop.permute.xlu0 %957
        %959 = vrot.lane.b32.xlu0 %v944, 112
        %v960 = vpop.permute.xlu0 %959
        %s961 = scalar_lea.vmem %s266, 48 [#allocation8]
        %962 = vst.msk [vmem:[%s961] sm:$0x3] %vm450, %v946
        %963 = vst.msk [vmem:[%s961 + $0x2] sm:$0x3] %vm450, %v948
        %964 = vst.msk [vmem:[%s961 + $0x4] sm:$0x3] %vm450, %v950
        %965 = vst.msk [vmem:[%s961 + $0x6] sm:$0x3] %vm450, %v952
        %966 = vst.msk [vmem:[%s961 + $0x8] sm:$0x3] %vm450, %v954
        %967 = vst.msk [vmem:[%s961 + $0xa] sm:$0x3] %vm450, %v956
        %968 = vst.msk [vmem:[%s961 + $0xc] sm:$0x3] %vm450, %v958
        %969 = vst.msk [vmem:[%s961 + $0xe] sm:$0x3] %vm450, %v960
        %s970 = sand.u32 %s111, 1
        %s971 = scalar_lea.sflag [#allocation4], %s970
        %s972 = sand.u32 %s111, 1
        %s973 = smul.addr %s972, 256
        %s974 = scalar_lea.vmem [#allocation7], %s973
        %s975 = sand.u32 %s137, 1
        %s976 = scalar_lea.sflag [#allocation9], %s975
        %s977 = sand.u32 %s137, 1
        %s978 = smul.addr %s977, 64
        %s979 = scalar_lea.vmem [#allocation8], %s978
        // Predicated region
        $region41: #{data_preprocessing_forward.3} parent=31 // pred_check
          %p980 = pneg %p121
        $region42: #{data_preprocessing_forward.3} parent=31 // pred_check_branch
          %982 = sbr.rel (%p980) target = $region44
        $region43: #{data_preprocessing_forward.3} parent=31 // pred_region
          %s983 = smul.u32 4, %s26
          %s985 = ssub.s32 4096, 4096
          %986 = vsyncadd %s971, %s985
          %s987 = smul.addr %s983, 8
          %s988 = smul.addr %s987, 128
          %s989 = scalar_lea.hbm %s3, %s988
          %s990 = sshll.u32 %s974, 4
          %s991 = int_to_ptr.vmem [resolvable:$true] %s990
          %996 = dma.vmem_to_hbm [thread:$0]  %s991, 4096, %s989, %s971, 128, 128, 8
        $region44: #{data_preprocessing_forward.3} parent=31 // pred_fallthru
          _
        // Predicated region
        $region45: #{data_preprocessing_forward.3} parent=31 // pred_check
          %p997 = pneg %p147
        $region46: #{data_preprocessing_forward.3} parent=31 // pred_check_branch
          %999 = sbr.rel (%p997) target = $region48
        $region47: #{data_preprocessing_forward.3} parent=31 // pred_region
          %s1000 = smul.u32 4, %s26
          %s1002 = ssub.s32 1024, 1024
          %1003 = vsyncadd %s976, %s1002
          %s1004 = smul.addr %s1000, 8
          %s1005 = smul.addr %s1004, 32
          %s1006 = scalar_lea.hbm %s4, %s1005
          %s1007 = sshll.u32 %s979, 4
          %s1008 = int_to_ptr.vmem [resolvable:$true] %s1007
          %1013 = dma.vmem_to_hbm [thread:$0]  %s1008, 1024, %s1006, %s976, 32, 32, 2
        $region48: #{data_preprocessing_forward.3} parent=31 // pred_fallthru
          _
      $region32: #{data_preprocessing_forward.3} parent=5 // pred_fallthru
        _
      %p1014 = scmp.le.s32.totalorder 2, %s21
      // Predicated region
      $region49: #{data_preprocessing_forward.3} parent=5 // pred_check
        %p1015 = pneg %p1014
      $region50: #{data_preprocessing_forward.3} parent=5 // pred_check_branch
        %1017 = sbr.rel (%p1015) target = $region52
      $region51: #{data_preprocessing_forward.3} parent=5 // pred_region
        %s1018 = ssub.s32 %s21, 2
        // Predicated region
        $region53: #{data_preprocessing_forward.3} parent=51 // pred_check
          %p1019 = pneg %p127
        $region54: #{data_preprocessing_forward.3} parent=51 // pred_check_branch
          %1021 = sbr.rel (%p1019) target = $region56
        $region55: #{data_preprocessing_forward.3} parent=51 // pred_region
          %s1022 = sand.u32 %s112, 1
          %s1023 = scalar_lea.sflag [#allocation4], %s1022
          %s1024 = sand.u32 %s112, 1
          %s1025 = smul.addr %s1024, 256
          %s1026 = scalar_lea.vmem [#allocation7], %s1025
          %1027 = dma.done %s1023, 4096
        $region56: #{data_preprocessing_forward.3} parent=51 // pred_fallthru
          _
        // Predicated region
        $region57: #{data_preprocessing_forward.3} parent=51 // pred_check
          %p1028 = pneg %p153
        $region58: #{data_preprocessing_forward.3} parent=51 // pred_check_branch
          %1030 = sbr.rel (%p1028) target = $region60
        $region59: #{data_preprocessing_forward.3} parent=51 // pred_region
          %s1031 = sand.u32 %s138, 1
          %s1032 = scalar_lea.sflag [#allocation9], %s1031
          %s1033 = sand.u32 %s138, 1
          %s1034 = smul.addr %s1033, 64
          %s1035 = scalar_lea.vmem [#allocation8], %s1034
          %1036 = dma.done %s1032, 1024
        $region60: #{data_preprocessing_forward.3} parent=51 // pred_fallthru
          _
      $region52: #{data_preprocessing_forward.3} parent=5 // pred_fallthru
        _
    $region6: #{data_preprocessing_forward.3} parent=1 // loop_footer
      %s25 = sadd.s32 1, %s21
    $region7: #{data_preprocessing_forward.3} parent=1 // loop_footer_branch
      %20 = sbr.rel target = $region3
    $region8: #{data_preprocessing_forward.3} parent=1 // loop_exit
      _
    %1037 = vsyncpa [#allocation3], 1
    %s1038 = scalar_lea.sflag [#allocation3], 1
    %1039 = vsyncpa %s1038, 1
    %1040 = vsyncpa [#allocation4], 1
    %s1041 = scalar_lea.sflag [#allocation4], 1
    %1042 = vsyncpa %s1041, 1
    %1043 = vsyncpa [#allocation9], 1
    %s1044 = scalar_lea.sflag [#allocation9], 1
    %1045 = vsyncpa %s1044, 1
    %1046 = vsyncpa [#allocation5], 1
    %s1047 = scalar_lea.sflag [#allocation5], 1
    %1048 = vsyncpa %s1047, 1

</llo_original>
